<compile_context>
chip_gen: v7x
topology: tpu7x:2x2x1
jax: 0.10.0
libtpu: 0.0.40
codegen_flags: <defaults>
</compile_context>

<pallas_src>
import functools

import jax
import jax.numpy as jnp
from jax.experimental import pallas as pl
from jax.experimental.pallas import tpu as pltpu


def _cdiv(a, b):
    return -(-a // b)


def _round_up(v, m):
    return _cdiv(v, m) * m


def _pick_h_tile(H, h_tile):
    """Largest multiple of 128 <= h_tile that divides H; else keep H whole."""
    if H <= h_tile or H % 128 != 0 or h_tile < 128:
        return H
    best = 128
    for cand in range(128, h_tile + 1, 128):
        if H % cand == 0:
            best = cand
    return best


def _choose_row_tile(R, row_tile, pack, tH, vmem_budget):
    # v7x (64 MiB VMEM): keep the (tm, tH) f32 GELU intermediate modest.
    if vmem_budget < 64 * 1024 * 1024 and tH >= 2048:
        row_tile = min(row_tile, 256)
    # Aim for >= 4 row steps when R permits (megacore + pipeline overlap),
    # otherwise as many as the row count allows.
    want_steps = max(_cdiv(R, row_tile), min(4, max(1, R // pack)))
    tm = _round_up(_cdiv(R, want_steps), pack)
    return min(tm, _round_up(R, pack))


def _residual_ff_kernel(x_ref, w1_ref, b1_ref, w2_ref, b2_ref, o_ref, acc_ref):
    """out = GELU(x @ W1 + b1) @ W2 + b2 + x, accumulated over H tiles."""
    j = pl.program_id(1)

    x = x_ref[...]                                            # (tm, D) native dtype

    @pl.when(j == 0)
    def _():
        acc_ref[...] = jnp.zeros_like(acc_ref)

    # fn(x), first linear on this H tile: MXU in the weights' dtype (bf16 fast
    # path when weights are bf16), f32 accumulation.
    h = jnp.dot(x.astype(w1_ref.dtype), w1_ref[...],
                preferred_element_type=jnp.float32)           # (tm, tH) f32
    h = h + b1_ref[...].astype(jnp.float32)                   # broadcast (1, tH)
    h = jax.nn.gelu(h, approximate=True)                      # tanh GELU -> EUP

    # Second linear: partial contraction over this H tile, f32 accumulator.
    acc_ref[...] += jnp.dot(h.astype(w2_ref.dtype), w2_ref[...],
                            preferred_element_type=jnp.float32)   # (tm, D) f32

    @pl.when(j == pl.num_programs(1) - 1)
    def _():
        y = acc_ref[...] + b2_ref[...].astype(jnp.float32)
        # Residual connection: fn(x) + x  (the defining op of the module).
        o_ref[...] = (y + x.astype(jnp.float32)).astype(o_ref.dtype)


@functools.partial(jax.jit, static_argnums=(5, 6, 7, 8))
def _residual_ff_impl(x, w1, b1, w2, b2, row_tile, h_tile, vmem_budget,
                      single_buffer_invariants):
    B, N, D = x.shape
    H = w1.shape[1]
    R = B * N

    x2d = x.reshape(R, D)
    b1_2d = b1.reshape(1, H)
    b2_2d = b2.reshape(1, D)

    # Sublane packing of the row axis: 8 rows/vreg for 4-byte dtypes, 16 for bf16.
    pack = 8 if jnp.dtype(x.dtype).itemsize >= 4 else 16

    tH = _pick_h_tile(H, h_tile)
    n_h = H // tH
    tm = _choose_row_tile(R, row_tile, pack, tH, vmem_budget)
    n_rows = _cdiv(R, tm)                 # ragged last block handled by Pallas
    grid = (n_rows, n_h)

    def _spec(shape, index_map, mode=None):
        if mode is None:
            return pl.BlockSpec(shape, index_map)
        return pl.BlockSpec(shape, index_map, pipeline_mode=mode)

    inv_mode = pl.Buffered(1) if single_buffer_invariants else None
    # Weights/b1 are grid-invariant (single VMEM buffer) only when H is untiled.
    w_mode = inv_mode if n_h == 1 else None

    in_specs = [
        _spec((tm, D), lambda i, j: (i, 0)),           # x row tile (const over j)
        _spec((D, tH), lambda i, j: (0, j), w_mode),   # W1 tile
        _spec((1, tH), lambda i, j: (0, j), w_mode),   # b1 tile
        _spec((tH, D), lambda i, j: (j, 0), w_mode),   # W2 tile
        _spec((1, D), lambda i, j: (0, 0), inv_mode),  # b2 (always grid-invariant)
    ]
    out_specs = pl.BlockSpec((tm, D), lambda i, j: (i, 0))

    # VMEM budget: actual footprint with margin, capped below physical VMEM.
    xb = jnp.dtype(x.dtype).itemsize
    wb = jnp.dtype(w1.dtype).itemsize
    w_bufs = 1 if (n_h == 1 and single_buffer_invariants) else 2
    need = (
        4 * tm * D * xb                                    # double-buffered x + out tiles
        + w_bufs * (D * tH + tH * D) * wb                  # W1 + W2 tiles
        + w_bufs * 8 * tH * jnp.dtype(b1.dtype).itemsize   # b1 (sublane-padded)
        + 8 * D * jnp.dtype(b2.dtype).itemsize             # b2
        + tm * D * 4                                       # f32 accumulator scratch
        + tm * tH * 4                                       # f32 GELU intermediate
    )
    vmem_limit = int(min(max(2 * need, 32 * 1024 * 1024), vmem_budget))

    out_bytes = R * D * xb
    cost = pl.CostEstimate(
        flops=4 * R * D * H,                               # two matmuls
        transcendentals=R * H,                             # tanh GELU
        bytes_accessed=(R * D * xb + out_bytes + 2 * D * H * wb
                        + H * jnp.dtype(b1.dtype).itemsize
                        + D * jnp.dtype(b2.dtype).itemsize),
    )

    out2d = pl.pallas_call(
        _residual_ff_kernel,
        out_shape=jax.ShapeDtypeStruct((R, D), x.dtype),
        grid_spec=pltpu.PrefetchScalarGridSpec(
            num_scalar_prefetch=0,
            grid=grid,
            in_specs=in_specs,
            out_specs=out_specs,
            scratch_shapes=[pltpu.VMEM((tm, D), jnp.float32)],
        ),
        compiler_params=pltpu.CompilerParams(
            dimension_semantics=("parallel", "arbitrary"),
            vmem_limit_bytes=vmem_limit,
        ),
        cost_estimate=cost,
    )(x2d, w1, b1_2d, w2, b2_2d)

    return out2d.reshape(B, N, D)


def residual_feedforward(x, w1, b1, w2, b2, *, row_tile=512, h_tile=1024):
    """Residual(FeedForward)(x) = FeedForward(x) + x.

    x:  (B, N, D)
    w1: (D, H)   b1: (H,)
    w2: (H, D)   b2: (D,)
    """
    try:
        cap = int(pltpu.get_tpu_info().vmem_capacity_bytes)
        budget = max(cap * 3 // 4, 32 * 1024 * 1024)
    except Exception:
        budget = 48 * 1024 * 1024          # safe on v7x (64 MiB) and v5e/v6e
    try:
        return _residual_ff_impl(x, w1, b1, w2, b2, row_tile, h_tile, budget, True)
    except Exception:
        # TODO(synk): pl.Buffered(1) single-buffering of grid-invariant weights
        # is a perf-only hint; fall back to default double buffering if the
        # installed Pallas version rejects buffer_count=1.
        return _residual_ff_impl(x, w1, b1, w2, b2, row_tile, h_tile, budget, False)


def _reference(x, w1, b1, w2, b2):
    h = jax.nn.gelu(
        jnp.einsum("bnd,dh->bnh", x.astype(jnp.float32), w1.astype(jnp.float32))
        + b1.astype(jnp.float32),
        approximate=True)
    y = jnp.einsum("bnh,hd->bnd", h, w2.astype(jnp.float32)) + b2.astype(jnp.float32)
    return (y + x.astype(jnp.float32)).astype(x.dtype)


if __name__ == "__main__":
    # Small but lane-dense shapes consistent with a transformer block:
    # batch=2, seq=64, dim=128, hidden=256.
    B, N, D, H = 2, 64, 128, 256

    key = jax.random.PRNGKey(0)
    kx, k1, k2, k3, k4 = jax.random.split(key, 5)

    x = jax.random.normal(kx, (B, N, D), dtype=jnp.float32)
    w1 = jax.random.normal(k1, (D, H), dtype=jnp.float32) * 0.05
    b1 = jax.random.normal(k2, (H,), dtype=jnp.float32) * 0.01
    w2 = jax.random.normal(k3, (H, D), dtype=jnp.float32) * 0.05
    b2 = jax.random.normal(k4, (D,), dtype=jnp.float32) * 0.01

    out = residual_feedforward(x, w1, b1, w2, b2)
    out = jax.block_until_ready(out)

    ref = _reference(x, w1, b1, w2, b2)
    assert out.shape == x.shape and out.dtype == x.dtype
    assert jnp.allclose(out, ref, atol=2e-3, rtol=2e-3), "mismatch vs reference"

    print("KERNEL_OK")
</pallas_src>

<mosaic_0001>
module attributes {stable_mosaic.version = 11 : i64} {
  func.func @_residual_ff_kernel(%arg0: i32, %arg1: i32, %arg2: memref<32x128xf32, #tpu.memory_space<vmem>>, %arg3: memref<128x256xf32, #tpu.memory_space<vmem>>, %arg4: memref<1x256xf32, #tpu.memory_space<vmem>>, %arg5: memref<256x128xf32, #tpu.memory_space<vmem>>, %arg6: memref<1x128xf32, #tpu.memory_space<vmem>>, %arg7: memref<32x128xf32, #tpu.memory_space<vmem>>, %arg8: memref<32x128xf32, #tpu.memory_space<vmem>>) attributes {dimension_semantics = [#tpu.dimension_semantics<parallel>, #tpu.dimension_semantics<arbitrary>], iteration_bounds = array<i64: 4, 1>, scalar_prefetch = 0 : i64, scratch_operands = 1 : i64, tpu.core_type = #tpu.core_type<tc>, window_params = [{transform_indices = @transform_0, window_bounds = array<i64: 32, 128>}, {pipeline_mode = #tpu.pipeline_mode<synchronous>, transform_indices = @transform_1, window_bounds = array<i64: 128, 256>}, {pipeline_mode = #tpu.pipeline_mode<synchronous>, transform_indices = @transform_2, window_bounds = array<i64: 1, 256>}, {pipeline_mode = #tpu.pipeline_mode<synchronous>, transform_indices = @transform_3, window_bounds = array<i64: 256, 128>}, {pipeline_mode = #tpu.pipeline_mode<synchronous>, transform_indices = @transform_4, window_bounds = array<i64: 1, 128>}, {transform_indices = @transform_5, window_bounds = array<i64: 32, 128>}]} {
    %c0 = arith.constant 0 : index
    %c0_0 = arith.constant 0 : index
    %0 = vector.load %arg2[%c0, %c0_0] : memref<32x128xf32, #tpu.memory_space<vmem>>, vector<32x128xf32>
    %c0_i32 = arith.constant 0 : i32
    %1 = arith.cmpi eq, %arg1, %c0_i32 : i32
    %2 = arith.extui %1 : i1 to i32
    %c0_i32_1 = arith.constant 0 : i32
    %3 = arith.cmpi ne, %2, %c0_i32_1 : i32
    scf.if %3 {
      %cst_19 = arith.constant 0.000000e+00 : f32
      %30 = vector.broadcast %cst_19 : f32 to vector<32x128xf32>
      %c0_20 = arith.constant 0 : index
      %c0_21 = arith.constant 0 : index
      %31 = vector.load %arg8[%c0_20, %c0_21] : memref<32x128xf32, #tpu.memory_space<vmem>>, vector<32x128xf32>
      tpu.vector_store %arg8[%c0_20, %c0_21], %30 {strides = array<i32>} : memref<32x128xf32, #tpu.memory_space<vmem>>, vector<32x128xf32>,
    } else {
    }
    %c0_2 = arith.constant 0 : index
    %c0_3 = arith.constant 0 : index
    %4 = vector.load %arg3[%c0_2, %c0_3] : memref<128x256xf32, #tpu.memory_space<vmem>>, vector<128x256xf32>
    %cst = arith.constant dense<0.000000e+00> : vector<32x256xf32>
    %5 = tpu.matmul %0, %4, %cst {dimension_numbers = #tpu.dot_dimension_numbers<[1], [0], [0], [1], [0, 0, 1, 1], [], []>} : vector<32x128xf32>, vector<128x256xf32>, vector<32x256xf32> -> vector<32x256xf32>
    %c0_4 = arith.constant 0 : index
    %c0_5 = arith.constant 0 : index
    %6 = vector.load %arg4[%c0_4, %c0_5] : memref<1x256xf32, #tpu.memory_space<vmem>>, vector<1x256xf32>
    %7 = vector.broadcast %6 : vector<1x256xf32> to vector<32x256xf32>
    %8 = arith.addf %5, %7 : vector<32x256xf32>
    %9 = arith.mulf %8, %8 : vector<32x256xf32>
    %10 = arith.mulf %8, %9 : vector<32x256xf32>
    %cst_6 = arith.constant 4.471500e-02 : f32
    %11 = vector.broadcast %cst_6 : f32 to vector<32x256xf32>
    %12 = arith.mulf %11, %10 : vector<32x256xf32>
    %13 = arith.addf %8, %12 : vector<32x256xf32>
    %cst_7 = arith.constant 0.797884583 : f32
    %14 = vector.broadcast %cst_7 : f32 to vector<32x256xf32>
    %15 = arith.mulf %14, %13 : vector<32x256xf32>
    %16 = math.tanh %15 : vector<32x256xf32>
    %cst_8 = arith.constant 1.000000e+00 : f32
    %17 = vector.broadcast %cst_8 : f32 to vector<32x256xf32>
    %18 = arith.addf %17, %16 : vector<32x256xf32>
    %cst_9 = arith.constant 5.000000e-01 : f32
    %19 = vector.broadcast %cst_9 : f32 to vector<32x256xf32>
    %20 = arith.mulf %19, %18 : vector<32x256xf32>
    %21 = arith.mulf %8, %20 : vector<32x256xf32>
    %c0_10 = arith.constant 0 : index
    %c0_11 = arith.constant 0 : index
    %22 = vector.load %arg8[%c0_10, %c0_11] : memref<32x128xf32, #tpu.memory_space<vmem>>, vector<32x128xf32>
    %c0_12 = arith.constant 0 : index
    %c0_13 = arith.constant 0 : index
    %23 = vector.load %arg5[%c0_12, %c0_13] : memref<256x128xf32, #tpu.memory_space<vmem>>, vector<256x128xf32>
    %cst_14 = arith.constant dense<0.000000e+00> : vector<32x128xf32>
    %24 = tpu.matmul %21, %23, %cst_14 {dimension_numbers = #tpu.dot_dimension_numbers<[1], [0], [0], [1], [0, 0, 1, 1], [], []>} : vector<32x256xf32>, vector<256x128xf32>, vector<32x128xf32> -> vector<32x128xf32>
    %25 = arith.addf %22, %24 : vector<32x128xf32>
    %c0_15 = arith.constant 0 : index
    %c0_16 = arith.constant 0 : index
    %26 = vector.load %arg8[%c0_15, %c0_16] : memref<32x128xf32, #tpu.memory_space<vmem>>, vector<32x128xf32>
    tpu.vector_store %arg8[%c0_15, %c0_16], %25 {strides = array<i32>} : memref<32x128xf32, #tpu.memory_space<vmem>>, vector<32x128xf32>,
    %c0_i32_17 = arith.constant 0 : i32
    %27 = arith.cmpi eq, %arg1, %c0_i32_17 : i32
    %28 = arith.extui %27 : i1 to i32
    %c0_i32_18 = arith.constant 0 : i32
    %29 = arith.cmpi ne, %28, %c0_i32_18 : i32
    scf.if %29 {
      %c0_19 = arith.constant 0 : index
      %c0_20 = arith.constant 0 : index
      %30 = vector.load %arg8[%c0_19, %c0_20] : memref<32x128xf32, #tpu.memory_space<vmem>>, vector<32x128xf32>
      %c0_21 = arith.constant 0 : index
      %c0_22 = arith.constant 0 : index
      %31 = vector.load %arg6[%c0_21, %c0_22] : memref<1x128xf32, #tpu.memory_space<vmem>>, vector<1x128xf32>
      %32 = vector.broadcast %31 : vector<1x128xf32> to vector<32x128xf32>
      %33 = arith.addf %30, %32 : vector<32x128xf32>
      %34 = arith.addf %33, %0 : vector<32x128xf32>
      %c0_23 = arith.constant 0 : index
      %c0_24 = arith.constant 0 : index
      %35 = vector.load %arg7[%c0_23, %c0_24] : memref<32x128xf32, #tpu.memory_space<vmem>>, vector<32x128xf32>
      tpu.vector_store %arg7[%c0_23, %c0_24], %34 {strides = array<i32>} : memref<32x128xf32, #tpu.memory_space<vmem>>, vector<32x128xf32>,
    } else {
    }
    return
  }
  func.func @transform_0(%arg0: i32, %arg1: i32) -> (i32, i32) {
    %c0_i32 = arith.constant 0 : i32
    %c0_i32_0 = arith.constant 0 : i32
    return %arg0, %c0_i32 : i32, i32
  }
  func.func @transform_1(%arg0: i32, %arg1: i32) -> (i32, i32) {
    %c0_i32 = arith.constant 0 : i32
    %c0_i32_0 = arith.constant 0 : i32
    return %c0_i32, %arg1 : i32, i32
  }
  func.func @transform_2(%arg0: i32, %arg1: i32) -> (i32, i32) {
    %c0_i32 = arith.constant 0 : i32
    %c0_i32_0 = arith.constant 0 : i32
    return %c0_i32, %arg1 : i32, i32
  }
  func.func @transform_3(%arg0: i32, %arg1: i32) -> (i32, i32) {
    %c0_i32 = arith.constant 0 : i32
    %c0_i32_0 = arith.constant 0 : i32
    return %arg1, %c0_i32 : i32, i32
  }
  func.func @transform_4(%arg0: i32, %arg1: i32) -> (i32, i32) {
    %c0_i32 = arith.constant 0 : i32
    %c0_i32_0 = arith.constant 0 : i32
    %c0_i32_1 = arith.constant 0 : i32
    return %c0_i32, %c0_i32_0 : i32, i32
  }
  func.func @transform_5(%arg0: i32, %arg1: i32) -> (i32, i32) {
    %c0_i32 = arith.constant 0 : i32
    %c0_i32_0 = arith.constant 0 : i32
    return %arg0, %c0_i32 : i32, i32
  }
}

module attributes {stable_mosaic.version = 11 : i64} {
  func.func @_residual_ff_kernel(%arg0: i32, %arg1: i32, %arg2: memref<32x128xf32, #tpu.memory_space<vmem>>, %arg3: memref<128x256xf32, #tpu.memory_space<vmem>>, %arg4: memref<1x256xf32, #tpu.memory_space<vmem>>, %arg5: memref<256x128xf32, #tpu.memory_space<vmem>>, %arg6: memref<1x128xf32, #tpu.memory_space<vmem>>, %arg7: memref<32x128xf32, #tpu.memory_space<vmem>>, %arg8: memref<32x128xf32, #tpu.memory_space<vmem>>) attributes {dimension_semantics = [#tpu.dimension_semantics<parallel>, #tpu.dimension_semantics<arbitrary>], iteration_bounds = array<i64: 4, 1>, scalar_prefetch = 0 : i64, scratch_operands = 1 : i64, tpu.core_type = #tpu.core_type<tc>, window_params = [{transform_indices = @transform_0, window_bounds = array<i64: 32, 128>}, {transform_indices = @transform_1, window_bounds = array<i64: 128, 256>}, {transform_indices = @transform_2, window_bounds = array<i64: 1, 256>}, {transform_indices = @transform_3, window_bounds = array<i64: 256, 128>}, {pipeline_mode = #tpu.pipeline_mode<synchronous>, transform_indices = @transform_4, window_bounds = array<i64: 1, 128>}, {transform_indices = @transform_5, window_bounds = array<i64: 32, 128>}]} {
    %c0 = arith.constant 0 : index
    %c0_0 = arith.constant 0 : index
    %0 = vector.load %arg2[%c0, %c0_0] : memref<32x128xf32, #tpu.memory_space<vmem>>, vector<32x128xf32>
    %c0_i32 = arith.constant 0 : i32
    %1 = arith.cmpi eq, %arg1, %c0_i32 : i32
    %2 = arith.extui %1 : i1 to i32
    %c0_i32_1 = arith.constant 0 : i32
    %3 = arith.cmpi ne, %2, %c0_i32_1 : i32
    scf.if %3 {
      %cst_19 = arith.constant 0.000000e+00 : f32
      %30 = vector.broadcast %cst_19 : f32 to vector<32x128xf32>
      %c0_20 = arith.constant 0 : index
      %c0_21 = arith.constant 0 : index
      %31 = vector.load %arg8[%c0_20, %c0_21] : memref<32x128xf32, #tpu.memory_space<vmem>>, vector<32x128xf32>
      tpu.vector_store %arg8[%c0_20, %c0_21], %30 {strides = array<i32>} : memref<32x128xf32, #tpu.memory_space<vmem>>, vector<32x128xf32>,
    } else {
    }
    %c0_2 = arith.constant 0 : index
    %c0_3 = arith.constant 0 : index
    %4 = vector.load %arg3[%c0_2, %c0_3] : memref<128x256xf32, #tpu.memory_space<vmem>>, vector<128x256xf32>
    %cst = arith.constant dense<0.000000e+00> : vector<32x256xf32>
    %5 = tpu.matmul %0, %4, %cst {dimension_numbers = #tpu.dot_dimension_numbers<[1], [0], [0], [1], [0, 0, 1, 1], [], []>} : vector<32x128xf32>, vector<128x256xf32>, vector<32x256xf32> -> vector<32x256xf32>
    %c0_4 = arith.constant 0 : index
    %c0_5 = arith.constant 0 : index
    %6 = vector.load %arg4[%c0_4, %c0_5] : memref<1x256xf32, #tpu.memory_space<vmem>>, vector<1x256xf32>
    %7 = vector.broadcast %6 : vector<1x256xf32> to vector<32x256xf32>
    %8 = arith.addf %5, %7 : vector<32x256xf32>
    %9 = arith.mulf %8, %8 : vector<32x256xf32>
    %10 = arith.mulf %8, %9 : vector<32x256xf32>
    %cst_6 = arith.constant 4.471500e-02 : f32
    %11 = vector.broadcast %cst_6 : f32 to vector<32x256xf32>
    %12 = arith.mulf %11, %10 : vector<32x256xf32>
    %13 = arith.addf %8, %12 : vector<32x256xf32>
    %cst_7 = arith.constant 0.797884583 : f32
    %14 = vector.broadcast %cst_7 : f32 to vector<32x256xf32>
    %15 = arith.mulf %14, %13 : vector<32x256xf32>
    %16 = math.tanh %15 : vector<32x256xf32>
    %cst_8 = arith.constant 1.000000e+00 : f32
    %17 = vector.broadcast %cst_8 : f32 to vector<32x256xf32>
    %18 = arith.addf %17, %16 : vector<32x256xf32>
    %cst_9 = arith.constant 5.000000e-01 : f32
    %19 = vector.broadcast %cst_9 : f32 to vector<32x256xf32>
    %20 = arith.mulf %19, %18 : vector<32x256xf32>
    %21 = arith.mulf %8, %20 : vector<32x256xf32>
    %c0_10 = arith.constant 0 : index
    %c0_11 = arith.constant 0 : index
    %22 = vector.load %arg8[%c0_10, %c0_11] : memref<32x128xf32, #tpu.memory_space<vmem>>, vector<32x128xf32>
    %c0_12 = arith.constant 0 : index
    %c0_13 = arith.constant 0 : index
    %23 = vector.load %arg5[%c0_12, %c0_13] : memref<256x128xf32, #tpu.memory_space<vmem>>, vector<256x128xf32>
    %cst_14 = arith.constant dense<0.000000e+00> : vector<32x128xf32>
    %24 = tpu.matmul %21, %23, %cst_14 {dimension_numbers = #tpu.dot_dimension_numbers<[1], [0], [0], [1], [0, 0, 1, 1], [], []>} : vector<32x256xf32>, vector<256x128xf32>, vector<32x128xf32> -> vector<32x128xf32>
    %25 = arith.addf %22, %24 : vector<32x128xf32>
    %c0_15 = arith.constant 0 : index
    %c0_16 = arith.constant 0 : index
    %26 = vector.load %arg8[%c0_15, %c0_16] : memref<32x128xf32, #tpu.memory_space<vmem>>, vector<32x128xf32>
    tpu.vector_store %arg8[%c0_15, %c0_16], %25 {strides = array<i32>} : memref<32x128xf32, #tpu.memory_space<vmem>>, vector<32x128xf32>,
    %c0_i32_17 = arith.constant 0 : i32
    %27 = arith.cmpi eq, %arg1, %c0_i32_17 : i32
    %28 = arith.extui %27 : i1 to i32
    %c0_i32_18 = arith.constant 0 : i32
    %29 = arith.cmpi ne, %28, %c0_i32_18 : i32
    scf.if %29 {
      %c0_19 = arith.constant 0 : index
      %c0_20 = arith.constant 0 : index
      %30 = vector.load %arg8[%c0_19, %c0_20] : memref<32x128xf32, #tpu.memory_space<vmem>>, vector<32x128xf32>
      %c0_21 = arith.constant 0 : index
      %c0_22 = arith.constant 0 : index
      %31 = vector.load %arg6[%c0_21, %c0_22] : memref<1x128xf32, #tpu.memory_space<vmem>>, vector<1x128xf32>
      %32 = vector.broadcast %31 : vector<1x128xf32> to vector<32x128xf32>
      %33 = arith.addf %30, %32 : vector<32x128xf32>
      %34 = arith.addf %33, %0 : vector<32x128xf32>
      %c0_23 = arith.constant 0 : index
      %c0_24 = arith.constant 0 : index
      %35 = vector.load %arg7[%c0_23, %c0_24] : memref<32x128xf32, #tpu.memory_space<vmem>>, vector<32x128xf32>
      tpu.vector_store %arg7[%c0_23, %c0_24], %34 {strides = array<i32>} : memref<32x128xf32, #tpu.memory_space<vmem>>, vector<32x128xf32>,
    } else {
    }
    return
  }
  func.func @transform_0(%arg0: i32, %arg1: i32) -> (i32, i32) {
    %c0_i32 = arith.constant 0 : i32
    %c0_i32_0 = arith.constant 0 : i32
    return %arg0, %c0_i32 : i32, i32
  }
  func.func @transform_1(%arg0: i32, %arg1: i32) -> (i32, i32) {
    %c0_i32 = arith.constant 0 : i32
    %c0_i32_0 = arith.constant 0 : i32
    return %c0_i32, %arg1 : i32, i32
  }
  func.func @transform_2(%arg0: i32, %arg1: i32) -> (i32, i32) {
    %c0_i32 = arith.constant 0 : i32
    %c0_i32_0 = arith.constant 0 : i32
    return %c0_i32, %arg1 : i32, i32
  }
  func.func @transform_3(%arg0: i32, %arg1: i32) -> (i32, i32) {
    %c0_i32 = arith.constant 0 : i32
    %c0_i32_0 = arith.constant 0 : i32
    return %arg1, %c0_i32 : i32, i32
  }
  func.func @transform_4(%arg0: i32, %arg1: i32) -> (i32, i32) {
    %c0_i32 = arith.constant 0 : i32
    %c0_i32_0 = arith.constant 0 : i32
    %c0_i32_1 = arith.constant 0 : i32
    return %c0_i32, %c0_i32_0 : i32, i32
  }
  func.func @transform_5(%arg0: i32, %arg1: i32) -> (i32, i32) {
    %c0_i32 = arith.constant 0 : i32
    %c0_i32_0 = arith.constant 0 : i32
    return %arg0, %c0_i32 : i32, i32
  }
}

</mosaic_0001>

<llo_original>
// kernel: _residual_ff_impl.1
$region0: #{_residual_ff_impl.1}
  #allocation0 [shape = 'u32[]', space=smem, size = 0x4, offset = 0x4, fixed_abs, tag = 'smem constant byte address 0x4 - core index']
  #allocation1 [shape = 'u32[144,128]{1,0:T(1,128)}', space=vmem, size = 0x12000, scoped, tag = 'internal scratch']
  #allocation2 [shape = 'f32[32,128]{1,0:T(8,128)}', space=vmem, size = 0x4000, scoped, tag = 'scratch operand']
  %s0 = inlined_call_operand.hbm [shape: f32[128,128], index: 0, kind: input, shape index: {}]
  %s1 = inlined_call_operand.hbm [shape: f32[128,256], index: 1, kind: input, shape index: {}]
  %s2 = inlined_call_operand.vmem [shape: f32[1,256], index: 2, kind: input, shape index: {}]
  %s3 = inlined_call_operand.hbm [shape: f32[256,128], index: 3, kind: input, shape index: {}]
  %s4 = inlined_call_operand.vmem [shape: f32[1,128], index: 4, kind: input, shape index: {}]
  %s5 = inlined_call_operand.hbm [shape: f32[128,128], index: 5, kind: output, shape index: {}]
  %s6 = sld [smem:[#allocation0]]
  $region73: #{_residual_ff_impl.1} parent=0
    _
  %s8 = ssub.s32 1, %s6
  %s9 = scalar_select 0, %s8, %s6
  $region1: #{_residual_ff_impl.1} parent=0
    #allocation3 [shape = 'u8[32768]{0}', space=vmem, size = 0x8000, scoped, tag = 'input window, operand 0']
    #allocation4 [shape = 's32[2]{0}', space=sflag, size = 0x8, scoped, tag = 'scoped memory for _residual_ff_impl.1']
    #allocation5 [shape = 's32[2]{0}', space=sflag, size = 0x8, scoped, tag = 'scoped memory for _residual_ff_impl.1']
    #allocation6 [shape = 'u8[131072]{0}', space=vmem, size = 0x20000, scoped, tag = 'input window, operand 1, single buffered']
    #allocation7 [shape = 's32[1]{0}', space=sflag, size = 0x4, scoped, tag = 'scoped memory for _residual_ff_impl.1']
    #allocation8 [shape = 'u8[131072]{0}', space=vmem, size = 0x20000, scoped, tag = 'input window, operand 3, single buffered']
    #allocation9 [shape = 'u8[32768]{0}', space=vmem, size = 0x8000, scoped, tag = 'output window, operand 0']
    %10 = vsyncpa [#allocation4], 0
    %s11 = scalar_lea.sflag [#allocation4], 1
    %12 = vsyncpa %s11, 0
    %13 = vsyncpa [#allocation7], 0
    %14 = vsyncpa [#allocation5], 0
    %s15 = scalar_lea.sflag [#allocation5], 1
    %16 = vsyncpa %s15, 0
    loop: start=0, step=1, limit=6
    $region2: #{_residual_ff_impl.1} parent=1 // loop_pre_header
      _
    $region3: #{_residual_ff_impl.1} parent=1 // loop_header
      %s18 = sphi 0, %s22
      %p19 = scmp.ge.s32.totalorder %s18, 6
      %s25 = sphi 0, %s37
      %s26 = sphi 0, %s33
      %s27 = sphi 0, %s25
      %s28 = sphi 0, %s26
      %s29 = sphi 0, %s27
      %s30 = sphi 0, %s28
      %s40 = sphi 0, %s42
      %s43 = sphi 0, %s40
      %s44 = sphi 0, %s43
      %s60 = sphi 0, %s44
      %s66 = sphi 0, %s68
      %s69 = sphi 0, %s66
      %s70 = sphi 0, %s69
      %s86 = sphi 0, %s70
      %s92 = sphi 0, %s94
      %s95 = sphi 0, %s92
      %s96 = sphi 0, %s95
      %s112 = sphi 0, %s96
      %s118 = sphi 0, %s120
      %s121 = sphi 0, %s118
      %s122 = sphi 0, %s121
      %s138 = sphi 0, %s122
      %s142 = sphi 0, %s142
      %s144 = sphi 0, %s142
      %s145 = sphi 0, %s144
      %s159 = sphi 0, %s145
      %s165 = sphi 0, %s167
      %s168 = sphi 0, %s165
      %s169 = sphi 0, %s168
      %s185 = sphi 0, %s169
    $region4: #{_residual_ff_impl.1} parent=1 // loop_header_branch
      %21 = sbr.rel (%p19) target = $region8
    $region5: #{_residual_ff_impl.1} parent=1 // loop_body
      %s23 = ssub.s32 %s18, 1
      %s24 = ssub.s32 %s18, 2
      %s31 = sadd.s32 1, %s26
      %p32 = scmp.ge.s32.totalorder %s31, 1
      %s33 = scalar_select %p32, 0, %s31
      %s34 = sadd.s32 1, %s25
      %s35 = scalar_select %p32, %s34, %s25
      %p36 = scmp.ge.s32.totalorder %s35, 4
      %s37 = scalar_select %p36, 0, %s35
      %s38 = ssub.s32 %s25, %s37
      %p39 = scmp.eq.s32.totalorder %s38, 0
      %s41 = sadd.s32 %s40, 1
      %s42 = scalar_select %p39, %s40, %s41
      %p45 = pneg %p39
      %p46 = scmp.eq.s32.totalorder %s18, 3
      %p47 = por %p45, %p46
      %p48 = scmp.ne.s32.totalorder %s40, %s43
      %p49 = scmp.eq.s32.totalorder %s18, 0
      %p50 = por %p48, %p49
      %p51 = scmp.ne.s32.totalorder %s40, %s43
      %p52 = scmp.eq.s32.totalorder %s23, 3
      %p53 = por %p51, %p52
      %p54 = scmp.ne.s32.totalorder %s43, %s44
      %p55 = scmp.eq.s32.totalorder %s23, 0
      %p56 = por %p54, %p55
      %p57 = scmp.ne.s32.totalorder %s43, %s44
      %p58 = scmp.eq.s32.totalorder %s24, 3
      %p59 = por %p57, %p58
      %p61 = scmp.ne.s32.totalorder %s44, %s60
      %p62 = scmp.eq.s32.totalorder %s24, 0
      %p63 = por %p61, %p62
      %s64 = ssub.s32 %s26, %s33
      %p65 = scmp.eq.s32.totalorder %s64, 0
      %s67 = sadd.s32 %s66, 1
      %s68 = scalar_select %p65, %s66, %s67
      %p71 = pneg %p65
      %p72 = scmp.eq.s32.totalorder %s18, 3
      %p73 = por %p71, %p72
      %p74 = scmp.ne.s32.totalorder %s66, %s69
      %p75 = scmp.eq.s32.totalorder %s18, 0
      %p76 = por %p74, %p75
      %p77 = scmp.ne.s32.totalorder %s66, %s69
      %p78 = scmp.eq.s32.totalorder %s23, 3
      %p79 = por %p77, %p78
      %p80 = scmp.ne.s32.totalorder %s69, %s70
      %p81 = scmp.eq.s32.totalorder %s23, 0
      %p82 = por %p80, %p81
      %p83 = scmp.ne.s32.totalorder %s69, %s70
      %p84 = scmp.eq.s32.totalorder %s24, 3
      %p85 = por %p83, %p84
      %p87 = scmp.ne.s32.totalorder %s70, %s86
      %p88 = scmp.eq.s32.totalorder %s24, 0
      %p89 = por %p87, %p88
      %s90 = ssub.s32 %s26, %s33
      %p91 = scmp.eq.s32.totalorder %s90, 0
      %s93 = sadd.s32 %s92, 1
      %s94 = scalar_select %p91, %s92, %s93
      %p97 = pneg %p91
      %p98 = scmp.eq.s32.totalorder %s18, 3
      %p99 = por %p97, %p98
      %p100 = scmp.ne.s32.totalorder %s92, %s95
      %p101 = scmp.eq.s32.totalorder %s18, 0
      %p102 = por %p100, %p101
      %p103 = scmp.ne.s32.totalorder %s92, %s95
      %p104 = scmp.eq.s32.totalorder %s23, 3
      %p105 = por %p103, %p104
      %p106 = scmp.ne.s32.totalorder %s95, %s96
      %p107 = scmp.eq.s32.totalorder %s23, 0
      %p108 = por %p106, %p107
      %p109 = scmp.ne.s32.totalorder %s95, %s96
      %p110 = scmp.eq.s32.totalorder %s24, 3
      %p111 = por %p109, %p110
      %p113 = scmp.ne.s32.totalorder %s96, %s112
      %p114 = scmp.eq.s32.totalorder %s24, 0
      %p115 = por %p113, %p114
      %s116 = ssub.s32 %s26, %s33
      %p117 = scmp.eq.s32.totalorder %s116, 0
      %s119 = sadd.s32 %s118, 1
      %s120 = scalar_select %p117, %s118, %s119
      %p123 = pneg %p117
      %p124 = scmp.eq.s32.totalorder %s18, 3
      %p125 = por %p123, %p124
      %p126 = scmp.ne.s32.totalorder %s118, %s121
      %p127 = scmp.eq.s32.totalorder %s18, 0
      %p128 = por %p126, %p127
      %p129 = scmp.ne.s32.totalorder %s118, %s121
      %p130 = scmp.eq.s32.totalorder %s23, 3
      %p131 = por %p129, %p130
      %p132 = scmp.ne.s32.totalorder %s121, %s122
      %p133 = scmp.eq.s32.totalorder %s23, 0
      %p134 = por %p132, %p133
      %p135 = scmp.ne.s32.totalorder %s121, %s122
      %p136 = scmp.eq.s32.totalorder %s24, 3
      %p137 = por %p135, %p136
      %p139 = scmp.ne.s32.totalorder %s122, %s138
      %p140 = scmp.eq.s32.totalorder %s24, 0
      %p141 = por %p139, %p140
      %s143 = sadd.s32 %s142, 1
      %p146 = scmp.eq.s32.totalorder %s18, 3
      %p147 = scmp.ne.s32.totalorder %s142, %s144
      %p148 = scmp.eq.s32.totalorder %s18, 0
      %p149 = por %p147, %p148
      %p150 = scmp.ne.s32.totalorder %s142, %s144
      %p151 = scmp.eq.s32.totalorder %s23, 3
      %p152 = por %p150, %p151
      %p153 = scmp.ne.s32.totalorder %s144, %s145
      %p154 = scmp.eq.s32.totalorder %s23, 0
      %p155 = por %p153, %p154
      %p156 = scmp.ne.s32.totalorder %s144, %s145
      %p157 = scmp.eq.s32.totalorder %s24, 3
      %p158 = por %p156, %p157
      %p160 = scmp.ne.s32.totalorder %s145, %s159
      %p161 = scmp.eq.s32.totalorder %s24, 0
      %p162 = por %p160, %p161
      %s163 = ssub.s32 %s25, %s37
      %p164 = scmp.eq.s32.totalorder %s163, 0
      %s166 = sadd.s32 %s165, 1
      %s167 = scalar_select %p164, %s165, %s166
      %p170 = pneg %p164
      %p171 = scmp.eq.s32.totalorder %s18, 3
      %p172 = por %p170, %p171
      %p173 = scmp.ne.s32.totalorder %s165, %s168
      %p174 = scmp.eq.s32.totalorder %s18, 0
      %p175 = por %p173, %p174
      %p176 = scmp.ne.s32.totalorder %s165, %s168
      %p177 = scmp.eq.s32.totalorder %s23, 3
      %p178 = por %p176, %p177
      %p179 = scmp.ne.s32.totalorder %s168, %s169
      %p180 = scmp.eq.s32.totalorder %s23, 0
      %p181 = por %p179, %p180
      %p182 = scmp.ne.s32.totalorder %s168, %s169
      %p183 = scmp.eq.s32.totalorder %s24, 3
      %p184 = por %p182, %p183
      %p186 = scmp.ne.s32.totalorder %s169, %s185
      %p187 = scmp.eq.s32.totalorder %s24, 0
      %p188 = por %p186, %p187
      %p189 = scmp.le.s32.totalorder 1, %s18
      %p190 = scmp.lt.s32.totalorder %s18, 5
      %p191 = pnand %p189, %p190
      %p192 = pneg %p191
      // Predicated region
      $region9: #{_residual_ff_impl.1} parent=5 // pred_check
        _
      $region10: #{_residual_ff_impl.1} parent=5 // pred_check_branch
        %194 = sbr.rel (%p191) target = $region12
      $region11: #{_residual_ff_impl.1} parent=5 // pred_region
        %s195 = ssub.s32 %s18, 1
        // Predicated region
        $region13: #{_residual_ff_impl.1} parent=11 // pred_check
          %p196 = pneg %p82
        $region14: #{_residual_ff_impl.1} parent=11 // pred_check_branch
          %198 = sbr.rel (%p196) target = $region16
        $region15: #{_residual_ff_impl.1} parent=11 // pred_region
          %s199 = smul.u32 2, %s28
          %s201 = ssub.s32 4096, 4096
          %202 = vsyncadd [#allocation7], %s201
          %s203 = smul.addr %s199, 128
          %s204 = scalar_lea.hbm %s1, %s203
          %s205 = sshll.u32 [#allocation6], 4
          %s206 = int_to_ptr.vmem [resolvable:$true] %s205
          %211 = dma.hbm_to_vmem [thread:$0]  %s204, 4096, %s206, [#allocation7], 256, 256, 16
        $region16: #{_residual_ff_impl.1} parent=11 // pred_fallthru
          _
        // Predicated region
        $region17: #{_residual_ff_impl.1} parent=11 // pred_check
          %p212 = pneg %p108
        $region18: #{_residual_ff_impl.1} parent=11 // pred_check_branch
          %214 = sbr.rel (%p212) target = $region20
        $region19: #{_residual_ff_impl.1} parent=11 // pred_region
          %s215 = smul.u32 2, %s28
          %p216 = scmp.lt.s32.totalorder %s215, 1
          %s217 = scalar_select %p216, %s215, 1
          %s218 = scalar_lea.vmem %s2, %s217
          %s219 = smul.u32 2, %s28
        $region20: #{_residual_ff_impl.1} parent=11 // pred_fallthru
          _
        // Predicated region
        $region21: #{_residual_ff_impl.1} parent=11 // pred_check
          %p220 = pneg %p134
        $region22: #{_residual_ff_impl.1} parent=11 // pred_check_branch
          %222 = sbr.rel (%p220) target = $region24
        $region23: #{_residual_ff_impl.1} parent=11 // pred_region
          %s223 = smul.u32 32, %s28
          %s225 = ssub.s32 4096, 4096
          %226 = vsyncadd [#allocation7], %s225
          %s227 = smul.addr %s223, 128
          %s228 = scalar_lea.hbm %s3, %s227
          %s229 = sshll.u32 [#allocation8], 4
          %s230 = int_to_ptr.vmem [resolvable:$true] %s229
          %235 = dma.hbm_to_vmem [thread:$0]  %s228, 4096, %s230, [#allocation7], 128, 128, 8
        $region24: #{_residual_ff_impl.1} parent=11 // pred_fallthru
          _
        // Predicated region
        $region25: #{_residual_ff_impl.1} parent=11 // pred_check
          %p236 = pneg %p155
        $region26: #{_residual_ff_impl.1} parent=11 // pred_check_branch
          %238 = sbr.rel (%p236) target = $region28
        $region27: #{_residual_ff_impl.1} parent=11 // pred_region
          _
        $region28: #{_residual_ff_impl.1} parent=11 // pred_fallthru
          _
      $region12: #{_residual_ff_impl.1} parent=5 // pred_fallthru
        _
      %p239 = scmp.lt.s32.totalorder %s18, 4
      // Predicated region
      $region29: #{_residual_ff_impl.1} parent=5 // pred_check
        %p240 = pneg %p239
      $region30: #{_residual_ff_impl.1} parent=5 // pred_check_branch
        %242 = sbr.rel (%p240) target = $region32
      $region31: #{_residual_ff_impl.1} parent=5 // pred_region
        // Predicated region
        $region33: #{_residual_ff_impl.1} parent=31 // pred_check
          %p243 = pneg %p50
        $region34: #{_residual_ff_impl.1} parent=31 // pred_check_branch
          %245 = sbr.rel (%p243) target = $region36
        $region35: #{_residual_ff_impl.1} parent=31 // pred_region
          %s246 = sand.u32 %s40, 1
          %s247 = scalar_lea.sflag [#allocation4], %s246
          %s248 = sand.u32 %s40, 1
          %s249 = smul.addr %s248, 32
          %s250 = scalar_lea.vmem [#allocation3], %s249
          %s251 = smul.u32 4, %s25
          %s253 = ssub.s32 512, 512
          %254 = vsyncadd %s247, %s253
          %s255 = smul.addr %s251, 128
          %s256 = scalar_lea.hbm %s0, %s255
          %s257 = sshll.u32 %s250, 4
          %s258 = int_to_ptr.vmem [resolvable:$true] %s257
          %263 = dma.hbm_to_vmem [thread:$0]  %s256, 512, %s258, %s247, 128, 128, 8
        $region36: #{_residual_ff_impl.1} parent=31 // pred_fallthru
          _
      $region32: #{_residual_ff_impl.1} parent=5 // pred_fallthru
        _
      %p264 = scmp.le.s32.totalorder 1, %s18
      %p265 = scmp.lt.s32.totalorder %s18, 5
      %p266 = pnand %p264, %p265
      %p267 = pneg %p266
      // Predicated region
      $region37: #{_residual_ff_impl.1} parent=5 // pred_check
        _
      $region38: #{_residual_ff_impl.1} parent=5 // pred_check_branch
        %269 = sbr.rel (%p266) target = $region40
      $region39: #{_residual_ff_impl.1} parent=5 // pred_region
        %s270 = ssub.s32 %s18, 1
        %s271 = sand.u32 %s43, 1
        %s272 = scalar_lea.sflag [#allocation4], %s271
        %s273 = sand.u32 %s43, 1
        %s274 = smul.addr %s273, 32
        %s275 = scalar_lea.vmem [#allocation3], %s274
        // Predicated region
        $region41: #{_residual_ff_impl.1} parent=39 // pred_check
          %p276 = pneg %p56
        $region42: #{_residual_ff_impl.1} parent=39 // pred_check_branch
          %278 = sbr.rel (%p276) target = $region44
        $region43: #{_residual_ff_impl.1} parent=39 // pred_region
          %279 = dma.done %s272, 512
        $region44: #{_residual_ff_impl.1} parent=39 // pred_fallthru
          _
        // Predicated region
        $region45: #{_residual_ff_impl.1} parent=39 // pred_check
          %p280 = pneg %p82
        $region46: #{_residual_ff_impl.1} parent=39 // pred_check_branch
          %282 = sbr.rel (%p280) target = $region48
        $region47: #{_residual_ff_impl.1} parent=39 // pred_region
          %283 = dma.done [#allocation7], 4096
        $region48: #{_residual_ff_impl.1} parent=39 // pred_fallthru
          _
        // Predicated region
        $region49: #{_residual_ff_impl.1} parent=39 // pred_check
          %p284 = pneg %p134
        $region50: #{_residual_ff_impl.1} parent=39 // pred_check_branch
          %286 = sbr.rel (%p284) target = $region52
        $region51: #{_residual_ff_impl.1} parent=39 // pred_region
          %287 = dma.done [#allocation7], 4096
        $region52: #{_residual_ff_impl.1} parent=39 // pred_fallthru
          _
        %s288 = sand.u32 %s43, 1
        %s289 = scalar_lea.sflag [#allocation4], %s288
        %s290 = sand.u32 %s43, 1
        %s291 = smul.addr %s290, 32
        %s292 = scalar_lea.vmem [#allocation3], %s291
        %p293 = pneg %p56
        %p294 = pneg %p53
        %p295 = pneg %p82
        %p296 = pneg %p79
        %s297 = smul.u32 2, %s28
        %p298 = scmp.lt.s32.totalorder %s297, 1
        %s299 = scalar_select %p298, %s297, 1
        %s300 = scalar_lea.vmem %s2, %s299
        %p301 = pneg %p108
        %p302 = pneg %p105
        %p303 = pneg %p134
        %p304 = pneg %p131
        %p305 = pneg %p155
        %p306 = pneg %p152
        %p307 = pneg %p181
        %p308 = pneg %p178
        %s309 = sand.u32 %s168, 1
        %s310 = scalar_lea.sflag [#allocation5], %s309
        %s311 = sand.u32 %s168, 1
        %s312 = smul.addr %s311, 32
        %s313 = scalar_lea.vmem [#allocation9], %s312
        %s314 = smul.u32 4, %s27
        %s315 = smul.u32 2, %s28
        %s316 = smul.u32 2, %s28
        %p317 = scmp.lt.s32.totalorder %s316, 1
        %s318 = scalar_select %p317, %s316, 1
        %s319 = scalar_lea.vmem %s2, %s318
        %s320 = smul.u32 2, %s28
        %s321 = smul.u32 32, %s28
        %s322 = smul.u32 4, %s27
        %v323 = vld [vmem:[%s275] sm:$0xff]
        %v324 = vld [vmem:[%s275 + $0x8] sm:$0xff]
        %v325 = vld [vmem:[%s275 + $0x10] sm:$0xff]
        %v326 = vld [vmem:[%s275 + $0x18] sm:$0xff]
        %p327 = scmp.eq.s32.totalorder %s28, 0
        // Predicated region
        $region53: #{_residual_ff_impl.1} parent=39 // pred_check
          %p328 = pneg %p327
        $region54: #{_residual_ff_impl.1} parent=39 // pred_check_branch
          %330 = sbr.rel (%p328) target = $region56
        $region55: #{_residual_ff_impl.1} parent=39 // pred_region
          %331 = vst [vmem:[#allocation2] sm:$0xff] 0.0
          %332 = vst [vmem:[#allocation2 + $0x8] sm:$0xff] 0.0
          %333 = vst [vmem:[#allocation2 + $0x10] sm:$0xff] 0.0
          %334 = vst [vmem:[#allocation2 + $0x18] sm:$0xff] 0.0
        $region56: #{_residual_ff_impl.1} parent=39 // pred_fallthru
          _
        %v335 = vld [vmem:[#allocation6] sm:$0xff]
        %v336 = vld [vmem:[#allocation6 + $0x8] sm:$0xff]
        %v337 = vld [vmem:[#allocation6 + $0x10] sm:$0xff]
        %v338 = vld [vmem:[#allocation6 + $0x18] sm:$0xff]
        %v339 = vld [vmem:[#allocation6 + $0x20] sm:$0xff]
        %v340 = vld [vmem:[#allocation6 + $0x28] sm:$0xff]
        %v341 = vld [vmem:[#allocation6 + $0x30] sm:$0xff]
        %v342 = vld [vmem:[#allocation6 + $0x38] sm:$0xff]
        %v343 = vld [vmem:[#allocation6 + $0x40] sm:$0xff]
        %v344 = vld [vmem:[#allocation6 + $0x48] sm:$0xff]
        %v345 = vld [vmem:[#allocation6 + $0x50] sm:$0xff]
        %v346 = vld [vmem:[#allocation6 + $0x58] sm:$0xff]
        %v347 = vld [vmem:[#allocation6 + $0x60] sm:$0xff]
        %v348 = vld [vmem:[#allocation6 + $0x68] sm:$0xff]
        %v349 = vld [vmem:[#allocation6 + $0x70] sm:$0xff]
        %v350 = vld [vmem:[#allocation6 + $0x78] sm:$0xff]
        %v351 = vld [vmem:[#allocation6 + $0x80] sm:$0xff]
        %v352 = vld [vmem:[#allocation6 + $0x88] sm:$0xff]
        %v353 = vld [vmem:[#allocation6 + $0x90] sm:$0xff]
        %v354 = vld [vmem:[#allocation6 + $0x98] sm:$0xff]
        %v355 = vld [vmem:[#allocation6 + $0xa0] sm:$0xff]
        %v356 = vld [vmem:[#allocation6 + $0xa8] sm:$0xff]
        %v357 = vld [vmem:[#allocation6 + $0xb0] sm:$0xff]
        %v358 = vld [vmem:[#allocation6 + $0xb8] sm:$0xff]
        %v359 = vld [vmem:[#allocation6 + $0xc0] sm:$0xff]
        %v360 = vld [vmem:[#allocation6 + $0xc8] sm:$0xff]
        %v361 = vld [vmem:[#allocation6 + $0xd0] sm:$0xff]
        %v362 = vld [vmem:[#allocation6 + $0xd8] sm:$0xff]
        %v363 = vld [vmem:[#allocation6 + $0xe0] sm:$0xff]
        %v364 = vld [vmem:[#allocation6 + $0xe8] sm:$0xff]
        %v365 = vld [vmem:[#allocation6 + $0xf0] sm:$0xff]
        %v366 = vld [vmem:[#allocation6 + $0xf8] sm:$0xff]
        %v367 = vld [vmem:[%s319] sm:$0x3]
        %v369 = vlaneseq
        %v370 = vshrl.u32 %v369, 7
        %v371 = vsub.s32 0, %v370
        %v372 = vrot.slane %v367, %v371
        %v373 = vlaneseq
        %v374 = vshrl.u32 %v373, 7
        %v375 = vsub.s32 1, %v374
        %v376 = vrot.slane %v367, %v375
        %379 = vmatprep.subr.mxu0 %v336
        %380 = vmatpush1.msra.mxu0 %v335
        %381 = vmatprep.subr.mxu0 %v338
        %382 = vmatpush1.msra.mxu0 %v337
        %383 = vmatprep.subr.mxu0 %v340
        %384 = vmatpush1.msra.mxu0 %v339
        %385 = vmatprep.subr.mxu0 %v342
        %386 = vmatpush1.msra.mxu0 %v341
        %387 = vmatprep.subr.mxu0 %v344
        %388 = vmatpush1.msra.mxu0 %v343
        %389 = vmatprep.subr.mxu0 %v346
        %390 = vmatpush1.msra.mxu0 %v345
        %391 = vmatprep.subr.mxu0 %v348
        %392 = vmatpush1.msra.mxu0 %v347
        %393 = vmatprep.subr.mxu0 %v350
        %394 = vmatpush1.msra.mxu0 %v349
        %395 = vmatprep.subr.mxu0 %v352
        %396 = vmatpush1.msra.mxu0 %v351
        %397 = vmatprep.subr.mxu0 %v354
        %398 = vmatpush1.msra.mxu0 %v353
        %399 = vmatprep.subr.mxu0 %v356
        %400 = vmatpush1.msra.mxu0 %v355
        %401 = vmatprep.subr.mxu0 %v358
        %402 = vmatpush1.msra.mxu0 %v357
        %403 = vmatprep.subr.mxu0 %v360
        %404 = vmatpush1.msra.mxu0 %v359
        %405 = vmatprep.subr.mxu0 %v362
        %406 = vmatpush1.msra.mxu0 %v361
        %407 = vmatprep.subr.mxu0 %v364
        %408 = vmatpush1.msra.mxu0 %v363
        %409 = vmatprep.subr.mxu0 %v366
        %410 = vmatpush1.msra.mxu0 %v365
        %411 = vmatprep.subr.mxu0 0.0
        %412 = vmatpush1.msra.mxu0 0.0
        %413 = vmatprep.subr.mxu0 0.0
        %414 = vmatpush1.msra.mxu0 0.0
        %415 = vmatprep.subr.mxu0 0.0
        %416 = vmatpush1.msra.mxu0 0.0
        %417 = vmatprep.subr.mxu0 0.0
        %418 = vmatpush1.msra.mxu0 0.0
        %419 = vmatprep.subr.mxu0 0.0
        %420 = vmatpush1.msra.mxu0 0.0
        %421 = vmatprep.subr.mxu0 0.0
        %422 = vmatpush1.msra.mxu0 0.0
        %423 = vmatprep.subr.mxu0 0.0
        %424 = vmatpush1.msra.mxu0 0.0
        %425 = vmatprep.subr.mxu0 0.0
        %426 = vmatpush1.msra.mxu0 0.0
        %427 = vmatprep.subr.mxu0 0.0
        %428 = vmatpush1.msra.mxu0 0.0
        %429 = vmatprep.subr.mxu0 0.0
        %430 = vmatpush1.msra.mxu0 0.0
        %431 = vmatprep.subr.mxu0 0.0
        %432 = vmatpush1.msra.mxu0 0.0
        %433 = vmatprep.subr.mxu0 0.0
        %434 = vmatpush1.msra.mxu0 0.0
        %435 = vmatprep.subr.mxu0 0.0
        %436 = vmatpush1.msra.mxu0 0.0
        %437 = vmatprep.subr.mxu0 0.0
        %438 = vmatpush1.msra.mxu0 0.0
        %439 = vmatprep.subr.mxu0 0.0
        %440 = vmatpush1.msra.mxu0 0.0
        %441 = vmatprep.subr.mxu0 0.0
        %442 = vmatpush1.msra.mxu0 0.0
        %443 = vmatprep.mubr.f32.mxu0 0.0
        %444 = vmatmul.mubr.f32.gmra.mrb[0].mxu0 %v323
        %v445 = vpop.f32.mrb[0].mxu0
        %v446 = vadd.f32 %v372, %v445
        %v447 = vpop.f32.mrb[0].mxu0
        %v448 = vadd.f32 %v376, %v447
        %449 = vmatprep.mubr.f32.mxu0 0.0
        %450 = vmatmul.mubr.f32.gmra.mrb[0].mxu0 %v324
        %v451 = vpop.f32.mrb[0].mxu0
        %v452 = vadd.f32 %v372, %v451
        %v453 = vpop.f32.mrb[0].mxu0
        %v454 = vadd.f32 %v376, %v453
        %455 = vmatprep.mubr.f32.mxu0 0.0
        %456 = vmatmul.mubr.f32.gmra.mrb[0].mxu0 %v325
        %v457 = vpop.f32.mrb[0].mxu0
        %v458 = vadd.f32 %v372, %v457
        %v459 = vpop.f32.mrb[0].mxu0
        %v460 = vadd.f32 %v376, %v459
        %461 = vmatprep.mubr.f32.mxu0 0.0
        %462 = vmatmul.mubr.f32.gmra.mrb[0].mxu0 %v326
        %v463 = vpop.f32.mrb[0].mxu0
        %v464 = vadd.f32 %v372, %v463
        %v465 = vpop.f32.mrb[0].mxu0
        %v466 = vadd.f32 %v376, %v465
        %467 = vdwg.mxu0
        %v468 = vmul.f32 %v446, %v446
        %v469 = vmul.f32 %v448, %v448
        %v470 = vmul.f32 %v452, %v452
        %v471 = vmul.f32 %v454, %v454
        %v472 = vmul.f32 %v458, %v458
        %v473 = vmul.f32 %v460, %v460
        %v474 = vmul.f32 %v464, %v464
        %v475 = vmul.f32 %v466, %v466
        %v476 = vmul.f32 %v446, %v468
        %v477 = vmul.f32 %v448, %v469
        %v478 = vmul.f32 %v452, %v470
        %v479 = vmul.f32 %v454, %v471
        %v480 = vmul.f32 %v458, %v472
        %v481 = vmul.f32 %v460, %v473
        %v482 = vmul.f32 %v464, %v474
        %v483 = vmul.f32 %v466, %v475
        %v484 = vmul.f32 %v476, 0.044715
        %v485 = vmul.f32 %v477, 0.044715
        %v486 = vmul.f32 %v478, 0.044715
        %v487 = vmul.f32 %v479, 0.044715
        %v488 = vmul.f32 %v480, 0.044715
        %v489 = vmul.f32 %v481, 0.044715
        %v490 = vmul.f32 %v482, 0.044715
        %v491 = vmul.f32 %v483, 0.044715
        %v492 = vadd.f32 %v446, %v484
        %v493 = vadd.f32 %v448, %v485
        %v494 = vadd.f32 %v452, %v486
        %v495 = vadd.f32 %v454, %v487
        %v496 = vadd.f32 %v458, %v488
        %v497 = vadd.f32 %v460, %v489
        %v498 = vadd.f32 %v464, %v490
        %v499 = vadd.f32 %v466, %v491
        %v500 = vmul.f32 %v492, 0.7978846
        %v501 = vmul.f32 %v493, 0.7978846
        %v502 = vmul.f32 %v494, 0.7978846
        %v503 = vmul.f32 %v495, 0.7978846
        %v504 = vmul.f32 %v496, 0.7978846
        %v505 = vmul.f32 %v497, 0.7978846
        %v506 = vmul.f32 %v498, 0.7978846
        %v507 = vmul.f32 %v499, 0.7978846
        %v508 = vtanh.pop %v500
        %v509 = vtanh.pop %v501
        %v510 = vtanh.pop %v502
        %v511 = vtanh.pop %v503
        %v512 = vtanh.pop %v504
        %v513 = vtanh.pop %v505
        %v514 = vtanh.pop %v506
        %v515 = vtanh.pop %v507
        %v516 = vadd.f32 %v508, 1.0
        %v517 = vadd.f32 %v509, 1.0
        %v518 = vadd.f32 %v510, 1.0
        %v519 = vadd.f32 %v511, 1.0
        %v520 = vadd.f32 %v512, 1.0
        %v521 = vadd.f32 %v513, 1.0
        %v522 = vadd.f32 %v514, 1.0
        %v523 = vadd.f32 %v515, 1.0
        %v524 = vmul.f32 %v516, 0.5
        %v525 = vmul.f32 %v517, 0.5
        %v526 = vmul.f32 %v518, 0.5
        %v527 = vmul.f32 %v519, 0.5
        %v528 = vmul.f32 %v520, 0.5
        %v529 = vmul.f32 %v521, 0.5
        %v530 = vmul.f32 %v522, 0.5
        %v531 = vmul.f32 %v523, 0.5
        %v532 = vmul.f32 %v446, %v524
        %v533 = vmul.f32 %v448, %v525
        %v534 = vmul.f32 %v452, %v526
        %v535 = vmul.f32 %v454, %v527
        %v536 = vmul.f32 %v458, %v528
        %v537 = vmul.f32 %v460, %v529
        %v538 = vmul.f32 %v464, %v530
        %v539 = vmul.f32 %v466, %v531
        %v540 = vld [vmem:[#allocation2] sm:$0xff]
        %v541 = vld [vmem:[#allocation2 + $0x8] sm:$0xff]
        %v542 = vld [vmem:[#allocation2 + $0x10] sm:$0xff]
        %v543 = vld [vmem:[#allocation2 + $0x18] sm:$0xff]
        %v544 = vld [vmem:[#allocation8] sm:$0xff]
        %v545 = vld [vmem:[#allocation8 + $0x8] sm:$0xff]
        %v546 = vld [vmem:[#allocation8 + $0x10] sm:$0xff]
        %v547 = vld [vmem:[#allocation8 + $0x18] sm:$0xff]
        %v548 = vld [vmem:[#allocation8 + $0x20] sm:$0xff]
        %v549 = vld [vmem:[#allocation8 + $0x28] sm:$0xff]
        %v550 = vld [vmem:[#allocation8 + $0x30] sm:$0xff]
        %v551 = vld [vmem:[#allocation8 + $0x38] sm:$0xff]
        %v552 = vld [vmem:[#allocation8 + $0x40] sm:$0xff]
        %v553 = vld [vmem:[#allocation8 + $0x48] sm:$0xff]
        %v554 = vld [vmem:[#allocation8 + $0x50] sm:$0xff]
        %v555 = vld [vmem:[#allocation8 + $0x58] sm:$0xff]
        %v556 = vld [vmem:[#allocation8 + $0x60] sm:$0xff]
        %v557 = vld [vmem:[#allocation8 + $0x68] sm:$0xff]
        %v558 = vld [vmem:[#allocation8 + $0x70] sm:$0xff]
        %v559 = vld [vmem:[#allocation8 + $0x78] sm:$0xff]
        %v560 = vld [vmem:[#allocation8 + $0x80] sm:$0xff]
        %v561 = vld [vmem:[#allocation8 + $0x88] sm:$0xff]
        %v562 = vld [vmem:[#allocation8 + $0x90] sm:$0xff]
        %v563 = vld [vmem:[#allocation8 + $0x98] sm:$0xff]
        %v564 = vld [vmem:[#allocation8 + $0xa0] sm:$0xff]
        %v565 = vld [vmem:[#allocation8 + $0xa8] sm:$0xff]
        %v566 = vld [vmem:[#allocation8 + $0xb0] sm:$0xff]
        %v567 = vld [vmem:[#allocation8 + $0xb8] sm:$0xff]
        %v568 = vld [vmem:[#allocation8 + $0xc0] sm:$0xff]
        %v569 = vld [vmem:[#allocation8 + $0xc8] sm:$0xff]
        %v570 = vld [vmem:[#allocation8 + $0xd0] sm:$0xff]
        %v571 = vld [vmem:[#allocation8 + $0xd8] sm:$0xff]
        %v572 = vld [vmem:[#allocation8 + $0xe0] sm:$0xff]
        %v573 = vld [vmem:[#allocation8 + $0xe8] sm:$0xff]
        %v574 = vld [vmem:[#allocation8 + $0xf0] sm:$0xff]
        %v575 = vld [vmem:[#allocation8 + $0xf8] sm:$0xff]
        %576 = vmatprep.subr.mxu0 0.0
        %577 = vmatpush1.msra.mxu0 %v544
        %578 = vmatprep.subr.mxu0 0.0
        %579 = vmatpush1.msra.mxu0 %v545
        %580 = vmatprep.subr.mxu0 0.0
        %581 = vmatpush1.msra.mxu0 %v546
        %582 = vmatprep.subr.mxu0 0.0
        %583 = vmatpush1.msra.mxu0 %v547
        %584 = vmatprep.subr.mxu0 0.0
        %585 = vmatpush1.msra.mxu0 %v548
        %586 = vmatprep.subr.mxu0 0.0
        %587 = vmatpush1.msra.mxu0 %v549
        %588 = vmatprep.subr.mxu0 0.0
        %589 = vmatpush1.msra.mxu0 %v550
        %590 = vmatprep.subr.mxu0 0.0
        %591 = vmatpush1.msra.mxu0 %v551
        %592 = vmatprep.subr.mxu0 0.0
        %593 = vmatpush1.msra.mxu0 %v552
        %594 = vmatprep.subr.mxu0 0.0
        %595 = vmatpush1.msra.mxu0 %v553
        %596 = vmatprep.subr.mxu0 0.0
        %597 = vmatpush1.msra.mxu0 %v554
        %598 = vmatprep.subr.mxu0 0.0
        %599 = vmatpush1.msra.mxu0 %v555
        %600 = vmatprep.subr.mxu0 0.0
        %601 = vmatpush1.msra.mxu0 %v556
        %602 = vmatprep.subr.mxu0 0.0
        %603 = vmatpush1.msra.mxu0 %v557
        %604 = vmatprep.subr.mxu0 0.0
        %605 = vmatpush1.msra.mxu0 %v558
        %606 = vmatprep.subr.mxu0 0.0
        %607 = vmatpush1.msra.mxu0 %v559
        %608 = vmatprep.subr.mxu0 0.0
        %609 = vmatpush1.msra.mxu0 %v560
        %610 = vmatprep.subr.mxu0 0.0
        %611 = vmatpush1.msra.mxu0 %v561
        %612 = vmatprep.subr.mxu0 0.0
        %613 = vmatpush1.msra.mxu0 %v562
        %614 = vmatprep.subr.mxu0 0.0
        %615 = vmatpush1.msra.mxu0 %v563
        %616 = vmatprep.subr.mxu0 0.0
        %617 = vmatpush1.msra.mxu0 %v564
        %618 = vmatprep.subr.mxu0 0.0
        %619 = vmatpush1.msra.mxu0 %v565
        %620 = vmatprep.subr.mxu0 0.0
        %621 = vmatpush1.msra.mxu0 %v566
        %622 = vmatprep.subr.mxu0 0.0
        %623 = vmatpush1.msra.mxu0 %v567
        %624 = vmatprep.subr.mxu0 0.0
        %625 = vmatpush1.msra.mxu0 %v568
        %626 = vmatprep.subr.mxu0 0.0
        %627 = vmatpush1.msra.mxu0 %v569
        %628 = vmatprep.subr.mxu0 0.0
        %629 = vmatpush1.msra.mxu0 %v570
        %630 = vmatprep.subr.mxu0 0.0
        %631 = vmatpush1.msra.mxu0 %v571
        %632 = vmatprep.subr.mxu0 0.0
        %633 = vmatpush1.msra.mxu0 %v572
        %634 = vmatprep.subr.mxu0 0.0
        %635 = vmatpush1.msra.mxu0 %v573
        %636 = vmatprep.subr.mxu0 0.0
        %637 = vmatpush1.msra.mxu0 %v574
        %638 = vmatprep.subr.mxu0 0.0
        %639 = vmatpush1.msra.mxu0 %v575
        %640 = vmatprep.mubr.f32.mxu0 %v533
        %641 = vmatmul.mubr.f32.gmra.mrb[0].mxu0 %v532
        %v642 = vpop.f32.mrb[0].mxu0
        %v643 = vadd.f32 0.0, %v642
        %v644 = vpop.f32.mrb[0].mxu0
        %645 = vmatprep.mubr.f32.mxu0 %v535
        %646 = vmatmul.mubr.f32.gmra.mrb[0].mxu0 %v534
        %v647 = vpop.f32.mrb[0].mxu0
        %v648 = vadd.f32 0.0, %v647
        %v649 = vpop.f32.mrb[0].mxu0
        %650 = vmatprep.mubr.f32.mxu0 %v537
        %651 = vmatmul.mubr.f32.gmra.mrb[0].mxu0 %v536
        %v652 = vpop.f32.mrb[0].mxu0
        %v653 = vadd.f32 0.0, %v652
        %v654 = vpop.f32.mrb[0].mxu0
        %655 = vmatprep.mubr.f32.mxu0 %v539
        %656 = vmatmul.mubr.f32.gmra.mrb[0].mxu0 %v538
        %v657 = vpop.f32.mrb[0].mxu0
        %v658 = vadd.f32 0.0, %v657
        %v659 = vpop.f32.mrb[0].mxu0
        %660 = vdwg.mxu0
        %v661 = vadd.f32 %v540, %v643
        %v662 = vadd.f32 %v541, %v648
        %v663 = vadd.f32 %v542, %v653
        %v664 = vadd.f32 %v543, %v658
        %665 = vst [vmem:[#allocation2] sm:$0xff] %v661
        %666 = vst [vmem:[#allocation2 + $0x8] sm:$0xff] %v662
        %667 = vst [vmem:[#allocation2 + $0x10] sm:$0xff] %v663
        %668 = vst [vmem:[#allocation2 + $0x18] sm:$0xff] %v664
        // Predicated region
        $region57: #{_residual_ff_impl.1} parent=39 // pred_check
          %p669 = pneg %p327
        $region58: #{_residual_ff_impl.1} parent=39 // pred_check_branch
          %671 = sbr.rel (%p669) target = $region60
        $region59: #{_residual_ff_impl.1} parent=39 // pred_region
          %v672 = vld [vmem:[#allocation2] sm:$0xff]
          %v673 = vld [vmem:[#allocation2 + $0x8] sm:$0xff]
          %v674 = vld [vmem:[#allocation2 + $0x10] sm:$0xff]
          %v675 = vld [vmem:[#allocation2 + $0x18] sm:$0xff]
          %v676 = vld [vmem:[%s4] sm:$0x1]
          %v678 = vlaneseq
          %v679 = vshrl.u32 %v678, 7
          %v680 = vsub.s32 0, %v679
          %v681 = vrot.slane %v676, %v680
          %v683 = vadd.f32 %v672, %v681
          %v684 = vadd.f32 %v673, %v681
          %v685 = vadd.f32 %v674, %v681
          %v686 = vadd.f32 %v675, %v681
          %v687 = vadd.f32 %v683, %v323
          %v688 = vadd.f32 %v684, %v324
          %v689 = vadd.f32 %v685, %v325
          %v690 = vadd.f32 %v686, %v326
          %691 = vst [vmem:[%s313] sm:$0xff] %v687
          %692 = vst [vmem:[%s313 + $0x8] sm:$0xff] %v688
          %693 = vst [vmem:[%s313 + $0x10] sm:$0xff] %v689
          %694 = vst [vmem:[%s313 + $0x18] sm:$0xff] %v690
        $region60: #{_residual_ff_impl.1} parent=39 // pred_fallthru
          _
        %s695 = sand.u32 %s168, 1
        %s696 = scalar_lea.sflag [#allocation5], %s695
        %s697 = sand.u32 %s168, 1
        %s698 = smul.addr %s697, 32
        %s699 = scalar_lea.vmem [#allocation9], %s698
        // Predicated region
        $region61: #{_residual_ff_impl.1} parent=39 // pred_check
          %p700 = pneg %p178
        $region62: #{_residual_ff_impl.1} parent=39 // pred_check_branch
          %702 = sbr.rel (%p700) target = $region64
        $region63: #{_residual_ff_impl.1} parent=39 // pred_region
          %s703 = smul.u32 4, %s27
          %s705 = ssub.s32 512, 512
          %706 = vsyncadd %s696, %s705
          %s707 = smul.addr %s703, 128
          %s708 = scalar_lea.hbm %s5, %s707
          %s709 = sshll.u32 %s699, 4
          %s710 = int_to_ptr.vmem [resolvable:$true] %s709
          %715 = dma.vmem_to_hbm [thread:$0]  %s710, 512, %s708, %s696, 128, 128, 8
        $region64: #{_residual_ff_impl.1} parent=39 // pred_fallthru
          _
      $region40: #{_residual_ff_impl.1} parent=5 // pred_fallthru
        _
      %p716 = scmp.le.s32.totalorder 2, %s18
      // Predicated region
      $region65: #{_residual_ff_impl.1} parent=5 // pred_check
        %p717 = pneg %p716
      $region66: #{_residual_ff_impl.1} parent=5 // pred_check_branch
        %719 = sbr.rel (%p717) target = $region68
      $region67: #{_residual_ff_impl.1} parent=5 // pred_region
        %s720 = ssub.s32 %s18, 2
        // Predicated region
        $region69: #{_residual_ff_impl.1} parent=67 // pred_check
          %p721 = pneg %p184
        $region70: #{_residual_ff_impl.1} parent=67 // pred_check_branch
          %723 = sbr.rel (%p721) target = $region72
        $region71: #{_residual_ff_impl.1} parent=67 // pred_region
          %s724 = sand.u32 %s169, 1
          %s725 = scalar_lea.sflag [#allocation5], %s724
          %s726 = sand.u32 %s169, 1
          %s727 = smul.addr %s726, 32
          %s728 = scalar_lea.vmem [#allocation9], %s727
          %729 = dma.done %s725, 512
        $region72: #{_residual_ff_impl.1} parent=67 // pred_fallthru
          _
      $region68: #{_residual_ff_impl.1} parent=5 // pred_fallthru
        _
    $region6: #{_residual_ff_impl.1} parent=1 // loop_footer
      %s22 = sadd.s32 1, %s18
    $region7: #{_residual_ff_impl.1} parent=1 // loop_footer_branch
      %17 = sbr.rel target = $region3
    $region8: #{_residual_ff_impl.1} parent=1 // loop_exit
      _
    %730 = vsyncpa [#allocation4], 1
    %s731 = scalar_lea.sflag [#allocation4], 1
    %732 = vsyncpa %s731, 1
    %733 = vsyncpa [#allocation7], 1
    %734 = vsyncpa [#allocation5], 1
    %s735 = scalar_lea.sflag [#allocation5], 1
    %736 = vsyncpa %s735, 1

// kernel: _residual_ff_impl.1
$region0: #{_residual_ff_impl.1}
  #allocation0 [shape = 'u32[]', space=smem, size = 0x4, offset = 0x4, fixed_abs, tag = 'smem constant byte address 0x4 - core index']
  #allocation1 [shape = 'u32[144,128]{1,0:T(1,128)}', space=vmem, size = 0x12000, scoped, tag = 'internal scratch']
  #allocation2 [shape = 'f32[32,128]{1,0:T(8,128)}', space=vmem, size = 0x4000, scoped, tag = 'scratch operand']
  %s0 = inlined_call_operand.hbm [shape: f32[128,128], index: 0, kind: input, shape index: {}]
  %s1 = inlined_call_operand.hbm [shape: f32[128,256], index: 1, kind: input, shape index: {}]
  %s2 = inlined_call_operand.vmem [shape: f32[1,256], index: 2, kind: input, shape index: {}]
  %s3 = inlined_call_operand.hbm [shape: f32[256,128], index: 3, kind: input, shape index: {}]
  %s4 = inlined_call_operand.vmem [shape: f32[1,128], index: 4, kind: input, shape index: {}]
  %s5 = inlined_call_operand.hbm [shape: f32[128,128], index: 5, kind: output, shape index: {}]
  %s6 = sld [smem:[#allocation0]]
  $region73: #{_residual_ff_impl.1} parent=0
    _
  %s8 = ssub.s32 1, %s6
  %s9 = scalar_select 0, %s8, %s6
  $region1: #{_residual_ff_impl.1} parent=0
    #allocation3 [shape = 'u8[32768]{0}', space=vmem, size = 0x8000, scoped, tag = 'input window, operand 0']
    #allocation4 [shape = 's32[2]{0}', space=sflag, size = 0x8, scoped, tag = 'scoped memory for _residual_ff_impl.1']
    #allocation5 [shape = 's32[2]{0}', space=sflag, size = 0x8, scoped, tag = 'scoped memory for _residual_ff_impl.1']
    #allocation6 [shape = 'u8[131072]{0}', space=vmem, size = 0x20000, scoped, tag = 'input window, operand 1, single buffered']
    #allocation7 [shape = 's32[1]{0}', space=sflag, size = 0x4, scoped, tag = 'scoped memory for _residual_ff_impl.1']
    #allocation8 [shape = 'u8[131072]{0}', space=vmem, size = 0x20000, scoped, tag = 'input window, operand 3, single buffered']
    #allocation9 [shape = 'u8[32768]{0}', space=vmem, size = 0x8000, scoped, tag = 'output window, operand 0']
    %10 = vsyncpa [#allocation4], 0
    %s11 = scalar_lea.sflag [#allocation4], 1
    %12 = vsyncpa %s11, 0
    %13 = vsyncpa [#allocation7], 0
    %14 = vsyncpa [#allocation5], 0
    %s15 = scalar_lea.sflag [#allocation5], 1
    %16 = vsyncpa %s15, 0
    loop: start=0, step=1, limit=6
    $region2: #{_residual_ff_impl.1} parent=1 // loop_pre_header
      _
    $region3: #{_residual_ff_impl.1} parent=1 // loop_header
      %s18 = sphi 0, %s22
      %p19 = scmp.ge.s32.totalorder %s18, 6
      %s25 = sphi 0, %s37
      %s26 = sphi 0, %s33
      %s27 = sphi 0, %s25
      %s28 = sphi 0, %s26
      %s29 = sphi 0, %s27
      %s30 = sphi 0, %s28
      %s40 = sphi 0, %s42
      %s43 = sphi 0, %s40
      %s44 = sphi 0, %s43
      %s60 = sphi 0, %s44
      %s66 = sphi 0, %s68
      %s69 = sphi 0, %s66
      %s70 = sphi 0, %s69
      %s86 = sphi 0, %s70
      %s92 = sphi 0, %s94
      %s95 = sphi 0, %s92
      %s96 = sphi 0, %s95
      %s112 = sphi 0, %s96
      %s118 = sphi 0, %s120
      %s121 = sphi 0, %s118
      %s122 = sphi 0, %s121
      %s138 = sphi 0, %s122
      %s142 = sphi 0, %s142
      %s144 = sphi 0, %s142
      %s145 = sphi 0, %s144
      %s159 = sphi 0, %s145
      %s165 = sphi 0, %s167
      %s168 = sphi 0, %s165
      %s169 = sphi 0, %s168
      %s185 = sphi 0, %s169
    $region4: #{_residual_ff_impl.1} parent=1 // loop_header_branch
      %21 = sbr.rel (%p19) target = $region8
    $region5: #{_residual_ff_impl.1} parent=1 // loop_body
      %s23 = ssub.s32 %s18, 1
      %s24 = ssub.s32 %s18, 2
      %s31 = sadd.s32 1, %s26
      %p32 = scmp.ge.s32.totalorder %s31, 1
      %s33 = scalar_select %p32, 0, %s31
      %s34 = sadd.s32 1, %s25
      %s35 = scalar_select %p32, %s34, %s25
      %p36 = scmp.ge.s32.totalorder %s35, 4
      %s37 = scalar_select %p36, 0, %s35
      %s38 = ssub.s32 %s25, %s37
      %p39 = scmp.eq.s32.totalorder %s38, 0
      %s41 = sadd.s32 %s40, 1
      %s42 = scalar_select %p39, %s40, %s41
      %p45 = pneg %p39
      %p46 = scmp.eq.s32.totalorder %s18, 3
      %p47 = por %p45, %p46
      %p48 = scmp.ne.s32.totalorder %s40, %s43
      %p49 = scmp.eq.s32.totalorder %s18, 0
      %p50 = por %p48, %p49
      %p51 = scmp.ne.s32.totalorder %s40, %s43
      %p52 = scmp.eq.s32.totalorder %s23, 3
      %p53 = por %p51, %p52
      %p54 = scmp.ne.s32.totalorder %s43, %s44
      %p55 = scmp.eq.s32.totalorder %s23, 0
      %p56 = por %p54, %p55
      %p57 = scmp.ne.s32.totalorder %s43, %s44
      %p58 = scmp.eq.s32.totalorder %s24, 3
      %p59 = por %p57, %p58
      %p61 = scmp.ne.s32.totalorder %s44, %s60
      %p62 = scmp.eq.s32.totalorder %s24, 0
      %p63 = por %p61, %p62
      %s64 = ssub.s32 %s26, %s33
      %p65 = scmp.eq.s32.totalorder %s64, 0
      %s67 = sadd.s32 %s66, 1
      %s68 = scalar_select %p65, %s66, %s67
      %p71 = pneg %p65
      %p72 = scmp.eq.s32.totalorder %s18, 3
      %p73 = por %p71, %p72
      %p74 = scmp.ne.s32.totalorder %s66, %s69
      %p75 = scmp.eq.s32.totalorder %s18, 0
      %p76 = por %p74, %p75
      %p77 = scmp.ne.s32.totalorder %s66, %s69
      %p78 = scmp.eq.s32.totalorder %s23, 3
      %p79 = por %p77, %p78
      %p80 = scmp.ne.s32.totalorder %s69, %s70
      %p81 = scmp.eq.s32.totalorder %s23, 0
      %p82 = por %p80, %p81
      %p83 = scmp.ne.s32.totalorder %s69, %s70
      %p84 = scmp.eq.s32.totalorder %s24, 3
      %p85 = por %p83, %p84
      %p87 = scmp.ne.s32.totalorder %s70, %s86
      %p88 = scmp.eq.s32.totalorder %s24, 0
      %p89 = por %p87, %p88
      %s90 = ssub.s32 %s26, %s33
      %p91 = scmp.eq.s32.totalorder %s90, 0
      %s93 = sadd.s32 %s92, 1
      %s94 = scalar_select %p91, %s92, %s93
      %p97 = pneg %p91
      %p98 = scmp.eq.s32.totalorder %s18, 3
      %p99 = por %p97, %p98
      %p100 = scmp.ne.s32.totalorder %s92, %s95
      %p101 = scmp.eq.s32.totalorder %s18, 0
      %p102 = por %p100, %p101
      %p103 = scmp.ne.s32.totalorder %s92, %s95
      %p104 = scmp.eq.s32.totalorder %s23, 3
      %p105 = por %p103, %p104
      %p106 = scmp.ne.s32.totalorder %s95, %s96
      %p107 = scmp.eq.s32.totalorder %s23, 0
      %p108 = por %p106, %p107
      %p109 = scmp.ne.s32.totalorder %s95, %s96
      %p110 = scmp.eq.s32.totalorder %s24, 3
      %p111 = por %p109, %p110
      %p113 = scmp.ne.s32.totalorder %s96, %s112
      %p114 = scmp.eq.s32.totalorder %s24, 0
      %p115 = por %p113, %p114
      %s116 = ssub.s32 %s26, %s33
      %p117 = scmp.eq.s32.totalorder %s116, 0
      %s119 = sadd.s32 %s118, 1
      %s120 = scalar_select %p117, %s118, %s119
      %p123 = pneg %p117
      %p124 = scmp.eq.s32.totalorder %s18, 3
      %p125 = por %p123, %p124
      %p126 = scmp.ne.s32.totalorder %s118, %s121
      %p127 = scmp.eq.s32.totalorder %s18, 0
      %p128 = por %p126, %p127
      %p129 = scmp.ne.s32.totalorder %s118, %s121
      %p130 = scmp.eq.s32.totalorder %s23, 3
      %p131 = por %p129, %p130
      %p132 = scmp.ne.s32.totalorder %s121, %s122
      %p133 = scmp.eq.s32.totalorder %s23, 0
      %p134 = por %p132, %p133
      %p135 = scmp.ne.s32.totalorder %s121, %s122
      %p136 = scmp.eq.s32.totalorder %s24, 3
      %p137 = por %p135, %p136
      %p139 = scmp.ne.s32.totalorder %s122, %s138
      %p140 = scmp.eq.s32.totalorder %s24, 0
      %p141 = por %p139, %p140
      %s143 = sadd.s32 %s142, 1
      %p146 = scmp.eq.s32.totalorder %s18, 3
      %p147 = scmp.ne.s32.totalorder %s142, %s144
      %p148 = scmp.eq.s32.totalorder %s18, 0
      %p149 = por %p147, %p148
      %p150 = scmp.ne.s32.totalorder %s142, %s144
      %p151 = scmp.eq.s32.totalorder %s23, 3
      %p152 = por %p150, %p151
      %p153 = scmp.ne.s32.totalorder %s144, %s145
      %p154 = scmp.eq.s32.totalorder %s23, 0
      %p155 = por %p153, %p154
      %p156 = scmp.ne.s32.totalorder %s144, %s145
      %p157 = scmp.eq.s32.totalorder %s24, 3
      %p158 = por %p156, %p157
      %p160 = scmp.ne.s32.totalorder %s145, %s159
      %p161 = scmp.eq.s32.totalorder %s24, 0
      %p162 = por %p160, %p161
      %s163 = ssub.s32 %s25, %s37
      %p164 = scmp.eq.s32.totalorder %s163, 0
      %s166 = sadd.s32 %s165, 1
      %s167 = scalar_select %p164, %s165, %s166
      %p170 = pneg %p164
      %p171 = scmp.eq.s32.totalorder %s18, 3
      %p172 = por %p170, %p171
      %p173 = scmp.ne.s32.totalorder %s165, %s168
      %p174 = scmp.eq.s32.totalorder %s18, 0
      %p175 = por %p173, %p174
      %p176 = scmp.ne.s32.totalorder %s165, %s168
      %p177 = scmp.eq.s32.totalorder %s23, 3
      %p178 = por %p176, %p177
      %p179 = scmp.ne.s32.totalorder %s168, %s169
      %p180 = scmp.eq.s32.totalorder %s23, 0
      %p181 = por %p179, %p180
      %p182 = scmp.ne.s32.totalorder %s168, %s169
      %p183 = scmp.eq.s32.totalorder %s24, 3
      %p184 = por %p182, %p183
      %p186 = scmp.ne.s32.totalorder %s169, %s185
      %p187 = scmp.eq.s32.totalorder %s24, 0
      %p188 = por %p186, %p187
      %p189 = scmp.le.s32.totalorder 1, %s18
      %p190 = scmp.lt.s32.totalorder %s18, 5
      %p191 = pnand %p189, %p190
      %p192 = pneg %p191
      // Predicated region
      $region9: #{_residual_ff_impl.1} parent=5 // pred_check
        _
      $region10: #{_residual_ff_impl.1} parent=5 // pred_check_branch
        %194 = sbr.rel (%p191) target = $region12
      $region11: #{_residual_ff_impl.1} parent=5 // pred_region
        %s195 = ssub.s32 %s18, 1
        // Predicated region
        $region13: #{_residual_ff_impl.1} parent=11 // pred_check
          %p196 = pneg %p82
        $region14: #{_residual_ff_impl.1} parent=11 // pred_check_branch
          %198 = sbr.rel (%p196) target = $region16
        $region15: #{_residual_ff_impl.1} parent=11 // pred_region
          %s199 = smul.u32 2, %s28
          %s201 = ssub.s32 4096, 4096
          %202 = vsyncadd [#allocation7], %s201
          %s203 = smul.addr %s199, 128
          %s204 = scalar_lea.hbm %s1, %s203
          %s205 = sshll.u32 [#allocation6], 4
          %s206 = int_to_ptr.vmem [resolvable:$true] %s205
          %211 = dma.hbm_to_vmem [thread:$0]  %s204, 4096, %s206, [#allocation7], 256, 256, 16
        $region16: #{_residual_ff_impl.1} parent=11 // pred_fallthru
          _
        // Predicated region
        $region17: #{_residual_ff_impl.1} parent=11 // pred_check
          %p212 = pneg %p108
        $region18: #{_residual_ff_impl.1} parent=11 // pred_check_branch
          %214 = sbr.rel (%p212) target = $region20
        $region19: #{_residual_ff_impl.1} parent=11 // pred_region
          %s215 = smul.u32 2, %s28
          %p216 = scmp.lt.s32.totalorder %s215, 1
          %s217 = scalar_select %p216, %s215, 1
          %s218 = scalar_lea.vmem %s2, %s217
          %s219 = smul.u32 2, %s28
        $region20: #{_residual_ff_impl.1} parent=11 // pred_fallthru
          _
        // Predicated region
        $region21: #{_residual_ff_impl.1} parent=11 // pred_check
          %p220 = pneg %p134
        $region22: #{_residual_ff_impl.1} parent=11 // pred_check_branch
          %222 = sbr.rel (%p220) target = $region24
        $region23: #{_residual_ff_impl.1} parent=11 // pred_region
          %s223 = smul.u32 32, %s28
          %s225 = ssub.s32 4096, 4096
          %226 = vsyncadd [#allocation7], %s225
          %s227 = smul.addr %s223, 128
          %s228 = scalar_lea.hbm %s3, %s227
          %s229 = sshll.u32 [#allocation8], 4
          %s230 = int_to_ptr.vmem [resolvable:$true] %s229
          %235 = dma.hbm_to_vmem [thread:$0]  %s228, 4096, %s230, [#allocation7], 128, 128, 8
        $region24: #{_residual_ff_impl.1} parent=11 // pred_fallthru
          _
        // Predicated region
        $region25: #{_residual_ff_impl.1} parent=11 // pred_check
          %p236 = pneg %p155
        $region26: #{_residual_ff_impl.1} parent=11 // pred_check_branch
          %238 = sbr.rel (%p236) target = $region28
        $region27: #{_residual_ff_impl.1} parent=11 // pred_region
          _
        $region28: #{_residual_ff_impl.1} parent=11 // pred_fallthru
          _
      $region12: #{_residual_ff_impl.1} parent=5 // pred_fallthru
        _
      %p239 = scmp.lt.s32.totalorder %s18, 4
      // Predicated region
      $region29: #{_residual_ff_impl.1} parent=5 // pred_check
        %p240 = pneg %p239
      $region30: #{_residual_ff_impl.1} parent=5 // pred_check_branch
        %242 = sbr.rel (%p240) target = $region32
      $region31: #{_residual_ff_impl.1} parent=5 // pred_region
        // Predicated region
        $region33: #{_residual_ff_impl.1} parent=31 // pred_check
          %p243 = pneg %p50
        $region34: #{_residual_ff_impl.1} parent=31 // pred_check_branch
          %245 = sbr.rel (%p243) target = $region36
        $region35: #{_residual_ff_impl.1} parent=31 // pred_region
          %s246 = sand.u32 %s40, 1
          %s247 = scalar_lea.sflag [#allocation4], %s246
          %s248 = sand.u32 %s40, 1
          %s249 = smul.addr %s248, 32
          %s250 = scalar_lea.vmem [#allocation3], %s249
          %s251 = smul.u32 4, %s25
          %s253 = ssub.s32 512, 512
          %254 = vsyncadd %s247, %s253
          %s255 = smul.addr %s251, 128
          %s256 = scalar_lea.hbm %s0, %s255
          %s257 = sshll.u32 %s250, 4
          %s258 = int_to_ptr.vmem [resolvable:$true] %s257
          %263 = dma.hbm_to_vmem [thread:$0]  %s256, 512, %s258, %s247, 128, 128, 8
        $region36: #{_residual_ff_impl.1} parent=31 // pred_fallthru
          _
      $region32: #{_residual_ff_impl.1} parent=5 // pred_fallthru
        _
      %p264 = scmp.le.s32.totalorder 1, %s18
      %p265 = scmp.lt.s32.totalorder %s18, 5
      %p266 = pnand %p264, %p265
      %p267 = pneg %p266
      // Predicated region
      $region37: #{_residual_ff_impl.1} parent=5 // pred_check
        _
      $region38: #{_residual_ff_impl.1} parent=5 // pred_check_branch
        %269 = sbr.rel (%p266) target = $region40
      $region39: #{_residual_ff_impl.1} parent=5 // pred_region
        %s270 = ssub.s32 %s18, 1
        %s271 = sand.u32 %s43, 1
        %s272 = scalar_lea.sflag [#allocation4], %s271
        %s273 = sand.u32 %s43, 1
        %s274 = smul.addr %s273, 32
        %s275 = scalar_lea.vmem [#allocation3], %s274
        // Predicated region
        $region41: #{_residual_ff_impl.1} parent=39 // pred_check
          %p276 = pneg %p56
        $region42: #{_residual_ff_impl.1} parent=39 // pred_check_branch
          %278 = sbr.rel (%p276) target = $region44
        $region43: #{_residual_ff_impl.1} parent=39 // pred_region
          %279 = dma.done %s272, 512
        $region44: #{_residual_ff_impl.1} parent=39 // pred_fallthru
          _
        // Predicated region
        $region45: #{_residual_ff_impl.1} parent=39 // pred_check
          %p280 = pneg %p82
        $region46: #{_residual_ff_impl.1} parent=39 // pred_check_branch
          %282 = sbr.rel (%p280) target = $region48
        $region47: #{_residual_ff_impl.1} parent=39 // pred_region
          %283 = dma.done [#allocation7], 4096
        $region48: #{_residual_ff_impl.1} parent=39 // pred_fallthru
          _
        // Predicated region
        $region49: #{_residual_ff_impl.1} parent=39 // pred_check
          %p284 = pneg %p134
        $region50: #{_residual_ff_impl.1} parent=39 // pred_check_branch
          %286 = sbr.rel (%p284) target = $region52
        $region51: #{_residual_ff_impl.1} parent=39 // pred_region
          %287 = dma.done [#allocation7], 4096
        $region52: #{_residual_ff_impl.1} parent=39 // pred_fallthru
          _
        %s288 = sand.u32 %s43, 1
        %s289 = scalar_lea.sflag [#allocation4], %s288
        %s290 = sand.u32 %s43, 1
        %s291 = smul.addr %s290, 32
        %s292 = scalar_lea.vmem [#allocation3], %s291
        %p293 = pneg %p56
        %p294 = pneg %p53
        %p295 = pneg %p82
        %p296 = pneg %p79
        %s297 = smul.u32 2, %s28
        %p298 = scmp.lt.s32.totalorder %s297, 1
        %s299 = scalar_select %p298, %s297, 1
        %s300 = scalar_lea.vmem %s2, %s299
        %p301 = pneg %p108
        %p302 = pneg %p105
        %p303 = pneg %p134
        %p304 = pneg %p131
        %p305 = pneg %p155
        %p306 = pneg %p152
        %p307 = pneg %p181
        %p308 = pneg %p178
        %s309 = sand.u32 %s168, 1
        %s310 = scalar_lea.sflag [#allocation5], %s309
        %s311 = sand.u32 %s168, 1
        %s312 = smul.addr %s311, 32
        %s313 = scalar_lea.vmem [#allocation9], %s312
        %s314 = smul.u32 4, %s27
        %s315 = smul.u32 2, %s28
        %s316 = smul.u32 2, %s28
        %p317 = scmp.lt.s32.totalorder %s316, 1
        %s318 = scalar_select %p317, %s316, 1
        %s319 = scalar_lea.vmem %s2, %s318
        %s320 = smul.u32 2, %s28
        %s321 = smul.u32 32, %s28
        %s322 = smul.u32 4, %s27
        %v323 = vld [vmem:[%s275] sm:$0xff]
        %v324 = vld [vmem:[%s275 + $0x8] sm:$0xff]
        %v325 = vld [vmem:[%s275 + $0x10] sm:$0xff]
        %v326 = vld [vmem:[%s275 + $0x18] sm:$0xff]
        %p327 = scmp.eq.s32.totalorder %s28, 0
        // Predicated region
        $region53: #{_residual_ff_impl.1} parent=39 // pred_check
          %p328 = pneg %p327
        $region54: #{_residual_ff_impl.1} parent=39 // pred_check_branch
          %330 = sbr.rel (%p328) target = $region56
        $region55: #{_residual_ff_impl.1} parent=39 // pred_region
          %331 = vst [vmem:[#allocation2] sm:$0xff] 0.0
          %332 = vst [vmem:[#allocation2 + $0x8] sm:$0xff] 0.0
          %333 = vst [vmem:[#allocation2 + $0x10] sm:$0xff] 0.0
          %334 = vst [vmem:[#allocation2 + $0x18] sm:$0xff] 0.0
        $region56: #{_residual_ff_impl.1} parent=39 // pred_fallthru
          _
        %v335 = vld [vmem:[#allocation6] sm:$0xff]
        %v336 = vld [vmem:[#allocation6 + $0x8] sm:$0xff]
        %v337 = vld [vmem:[#allocation6 + $0x10] sm:$0xff]
        %v338 = vld [vmem:[#allocation6 + $0x18] sm:$0xff]
        %v339 = vld [vmem:[#allocation6 + $0x20] sm:$0xff]
        %v340 = vld [vmem:[#allocation6 + $0x28] sm:$0xff]
        %v341 = vld [vmem:[#allocation6 + $0x30] sm:$0xff]
        %v342 = vld [vmem:[#allocation6 + $0x38] sm:$0xff]
        %v343 = vld [vmem:[#allocation6 + $0x40] sm:$0xff]
        %v344 = vld [vmem:[#allocation6 + $0x48] sm:$0xff]
        %v345 = vld [vmem:[#allocation6 + $0x50] sm:$0xff]
        %v346 = vld [vmem:[#allocation6 + $0x58] sm:$0xff]
        %v347 = vld [vmem:[#allocation6 + $0x60] sm:$0xff]
        %v348 = vld [vmem:[#allocation6 + $0x68] sm:$0xff]
        %v349 = vld [vmem:[#allocation6 + $0x70] sm:$0xff]
        %v350 = vld [vmem:[#allocation6 + $0x78] sm:$0xff]
        %v351 = vld [vmem:[#allocation6 + $0x80] sm:$0xff]
        %v352 = vld [vmem:[#allocation6 + $0x88] sm:$0xff]
        %v353 = vld [vmem:[#allocation6 + $0x90] sm:$0xff]
        %v354 = vld [vmem:[#allocation6 + $0x98] sm:$0xff]
        %v355 = vld [vmem:[#allocation6 + $0xa0] sm:$0xff]
        %v356 = vld [vmem:[#allocation6 + $0xa8] sm:$0xff]
        %v357 = vld [vmem:[#allocation6 + $0xb0] sm:$0xff]
        %v358 = vld [vmem:[#allocation6 + $0xb8] sm:$0xff]
        %v359 = vld [vmem:[#allocation6 + $0xc0] sm:$0xff]
        %v360 = vld [vmem:[#allocation6 + $0xc8] sm:$0xff]
        %v361 = vld [vmem:[#allocation6 + $0xd0] sm:$0xff]
        %v362 = vld [vmem:[#allocation6 + $0xd8] sm:$0xff]
        %v363 = vld [vmem:[#allocation6 + $0xe0] sm:$0xff]
        %v364 = vld [vmem:[#allocation6 + $0xe8] sm:$0xff]
        %v365 = vld [vmem:[#allocation6 + $0xf0] sm:$0xff]
        %v366 = vld [vmem:[#allocation6 + $0xf8] sm:$0xff]
        %v367 = vld [vmem:[%s319] sm:$0x3]
        %v369 = vlaneseq
        %v370 = vshrl.u32 %v369, 7
        %v371 = vsub.s32 0, %v370
        %v372 = vrot.slane %v367, %v371
        %v373 = vlaneseq
        %v374 = vshrl.u32 %v373, 7
        %v375 = vsub.s32 1, %v374
        %v376 = vrot.slane %v367, %v375
        %379 = vmatprep.subr.mxu0 %v336
        %380 = vmatpush1.msra.mxu0 %v335
        %381 = vmatprep.subr.mxu0 %v338
        %382 = vmatpush1.msra.mxu0 %v337
        %383 = vmatprep.subr.mxu0 %v340
        %384 = vmatpush1.msra.mxu0 %v339
        %385 = vmatprep.subr.mxu0 %v342
        %386 = vmatpush1.msra.mxu0 %v341
        %387 = vmatprep.subr.mxu0 %v344
        %388 = vmatpush1.msra.mxu0 %v343
        %389 = vmatprep.subr.mxu0 %v346
        %390 = vmatpush1.msra.mxu0 %v345
        %391 = vmatprep.subr.mxu0 %v348
        %392 = vmatpush1.msra.mxu0 %v347
        %393 = vmatprep.subr.mxu0 %v350
        %394 = vmatpush1.msra.mxu0 %v349
        %395 = vmatprep.subr.mxu0 %v352
        %396 = vmatpush1.msra.mxu0 %v351
        %397 = vmatprep.subr.mxu0 %v354
        %398 = vmatpush1.msra.mxu0 %v353
        %399 = vmatprep.subr.mxu0 %v356
        %400 = vmatpush1.msra.mxu0 %v355
        %401 = vmatprep.subr.mxu0 %v358
        %402 = vmatpush1.msra.mxu0 %v357
        %403 = vmatprep.subr.mxu0 %v360
        %404 = vmatpush1.msra.mxu0 %v359
        %405 = vmatprep.subr.mxu0 %v362
        %406 = vmatpush1.msra.mxu0 %v361
        %407 = vmatprep.subr.mxu0 %v364
        %408 = vmatpush1.msra.mxu0 %v363
        %409 = vmatprep.subr.mxu0 %v366
        %410 = vmatpush1.msra.mxu0 %v365
        %411 = vmatprep.subr.mxu0 0.0
        %412 = vmatpush1.msra.mxu0 0.0
        %413 = vmatprep.subr.mxu0 0.0
        %414 = vmatpush1.msra.mxu0 0.0
        %415 = vmatprep.subr.mxu0 0.0
        %416 = vmatpush1.msra.mxu0 0.0
        %417 = vmatprep.subr.mxu0 0.0
        %418 = vmatpush1.msra.mxu0 0.0
        %419 = vmatprep.subr.mxu0 0.0
        %420 = vmatpush1.msra.mxu0 0.0
        %421 = vmatprep.subr.mxu0 0.0
        %422 = vmatpush1.msra.mxu0 0.0
        %423 = vmatprep.subr.mxu0 0.0
        %424 = vmatpush1.msra.mxu0 0.0
        %425 = vmatprep.subr.mxu0 0.0
        %426 = vmatpush1.msra.mxu0 0.0
        %427 = vmatprep.subr.mxu0 0.0
        %428 = vmatpush1.msra.mxu0 0.0
        %429 = vmatprep.subr.mxu0 0.0
        %430 = vmatpush1.msra.mxu0 0.0
        %431 = vmatprep.subr.mxu0 0.0
        %432 = vmatpush1.msra.mxu0 0.0
        %433 = vmatprep.subr.mxu0 0.0
        %434 = vmatpush1.msra.mxu0 0.0
        %435 = vmatprep.subr.mxu0 0.0
        %436 = vmatpush1.msra.mxu0 0.0
        %437 = vmatprep.subr.mxu0 0.0
        %438 = vmatpush1.msra.mxu0 0.0
        %439 = vmatprep.subr.mxu0 0.0
        %440 = vmatpush1.msra.mxu0 0.0
        %441 = vmatprep.subr.mxu0 0.0
        %442 = vmatpush1.msra.mxu0 0.0
        %443 = vmatprep.mubr.f32.mxu0 0.0
        %444 = vmatmul.mubr.f32.gmra.mrb[0].mxu0 %v323
        %v445 = vpop.f32.mrb[0].mxu0
        %v446 = vadd.f32 %v372, %v445
        %v447 = vpop.f32.mrb[0].mxu0
        %v448 = vadd.f32 %v376, %v447
        %449 = vmatprep.mubr.f32.mxu0 0.0
        %450 = vmatmul.mubr.f32.gmra.mrb[0].mxu0 %v324
        %v451 = vpop.f32.mrb[0].mxu0
        %v452 = vadd.f32 %v372, %v451
        %v453 = vpop.f32.mrb[0].mxu0
        %v454 = vadd.f32 %v376, %v453
        %455 = vmatprep.mubr.f32.mxu0 0.0
        %456 = vmatmul.mubr.f32.gmra.mrb[0].mxu0 %v325
        %v457 = vpop.f32.mrb[0].mxu0
        %v458 = vadd.f32 %v372, %v457
        %v459 = vpop.f32.mrb[0].mxu0
        %v460 = vadd.f32 %v376, %v459
        %461 = vmatprep.mubr.f32.mxu0 0.0
        %462 = vmatmul.mubr.f32.gmra.mrb[0].mxu0 %v326
        %v463 = vpop.f32.mrb[0].mxu0
        %v464 = vadd.f32 %v372, %v463
        %v465 = vpop.f32.mrb[0].mxu0
        %v466 = vadd.f32 %v376, %v465
        %467 = vdwg.mxu0
        %v468 = vmul.f32 %v446, %v446
        %v469 = vmul.f32 %v448, %v448
        %v470 = vmul.f32 %v452, %v452
        %v471 = vmul.f32 %v454, %v454
        %v472 = vmul.f32 %v458, %v458
        %v473 = vmul.f32 %v460, %v460
        %v474 = vmul.f32 %v464, %v464
        %v475 = vmul.f32 %v466, %v466
        %v476 = vmul.f32 %v446, %v468
        %v477 = vmul.f32 %v448, %v469
        %v478 = vmul.f32 %v452, %v470
        %v479 = vmul.f32 %v454, %v471
        %v480 = vmul.f32 %v458, %v472
        %v481 = vmul.f32 %v460, %v473
        %v482 = vmul.f32 %v464, %v474
        %v483 = vmul.f32 %v466, %v475
        %v484 = vmul.f32 %v476, 0.044715
        %v485 = vmul.f32 %v477, 0.044715
        %v486 = vmul.f32 %v478, 0.044715
        %v487 = vmul.f32 %v479, 0.044715
        %v488 = vmul.f32 %v480, 0.044715
        %v489 = vmul.f32 %v481, 0.044715
        %v490 = vmul.f32 %v482, 0.044715
        %v491 = vmul.f32 %v483, 0.044715
        %v492 = vadd.f32 %v446, %v484
        %v493 = vadd.f32 %v448, %v485
        %v494 = vadd.f32 %v452, %v486
        %v495 = vadd.f32 %v454, %v487
        %v496 = vadd.f32 %v458, %v488
        %v497 = vadd.f32 %v460, %v489
        %v498 = vadd.f32 %v464, %v490
        %v499 = vadd.f32 %v466, %v491
        %v500 = vmul.f32 %v492, 0.7978846
        %v501 = vmul.f32 %v493, 0.7978846
        %v502 = vmul.f32 %v494, 0.7978846
        %v503 = vmul.f32 %v495, 0.7978846
        %v504 = vmul.f32 %v496, 0.7978846
        %v505 = vmul.f32 %v497, 0.7978846
        %v506 = vmul.f32 %v498, 0.7978846
        %v507 = vmul.f32 %v499, 0.7978846
        %v508 = vtanh.pop %v500
        %v509 = vtanh.pop %v501
        %v510 = vtanh.pop %v502
        %v511 = vtanh.pop %v503
        %v512 = vtanh.pop %v504
        %v513 = vtanh.pop %v505
        %v514 = vtanh.pop %v506
        %v515 = vtanh.pop %v507
        %v516 = vadd.f32 %v508, 1.0
        %v517 = vadd.f32 %v509, 1.0
        %v518 = vadd.f32 %v510, 1.0
        %v519 = vadd.f32 %v511, 1.0
        %v520 = vadd.f32 %v512, 1.0
        %v521 = vadd.f32 %v513, 1.0
        %v522 = vadd.f32 %v514, 1.0
        %v523 = vadd.f32 %v515, 1.0
        %v524 = vmul.f32 %v516, 0.5
        %v525 = vmul.f32 %v517, 0.5
        %v526 = vmul.f32 %v518, 0.5
        %v527 = vmul.f32 %v519, 0.5
        %v528 = vmul.f32 %v520, 0.5
        %v529 = vmul.f32 %v521, 0.5
        %v530 = vmul.f32 %v522, 0.5
        %v531 = vmul.f32 %v523, 0.5
        %v532 = vmul.f32 %v446, %v524
        %v533 = vmul.f32 %v448, %v525
        %v534 = vmul.f32 %v452, %v526
        %v535 = vmul.f32 %v454, %v527
        %v536 = vmul.f32 %v458, %v528
        %v537 = vmul.f32 %v460, %v529
        %v538 = vmul.f32 %v464, %v530
        %v539 = vmul.f32 %v466, %v531
        %v540 = vld [vmem:[#allocation2] sm:$0xff]
        %v541 = vld [vmem:[#allocation2 + $0x8] sm:$0xff]
        %v542 = vld [vmem:[#allocation2 + $0x10] sm:$0xff]
        %v543 = vld [vmem:[#allocation2 + $0x18] sm:$0xff]
        %v544 = vld [vmem:[#allocation8] sm:$0xff]
        %v545 = vld [vmem:[#allocation8 + $0x8] sm:$0xff]
        %v546 = vld [vmem:[#allocation8 + $0x10] sm:$0xff]
        %v547 = vld [vmem:[#allocation8 + $0x18] sm:$0xff]
        %v548 = vld [vmem:[#allocation8 + $0x20] sm:$0xff]
        %v549 = vld [vmem:[#allocation8 + $0x28] sm:$0xff]
        %v550 = vld [vmem:[#allocation8 + $0x30] sm:$0xff]
        %v551 = vld [vmem:[#allocation8 + $0x38] sm:$0xff]
        %v552 = vld [vmem:[#allocation8 + $0x40] sm:$0xff]
        %v553 = vld [vmem:[#allocation8 + $0x48] sm:$0xff]
        %v554 = vld [vmem:[#allocation8 + $0x50] sm:$0xff]
        %v555 = vld [vmem:[#allocation8 + $0x58] sm:$0xff]
        %v556 = vld [vmem:[#allocation8 + $0x60] sm:$0xff]
        %v557 = vld [vmem:[#allocation8 + $0x68] sm:$0xff]
        %v558 = vld [vmem:[#allocation8 + $0x70] sm:$0xff]
        %v559 = vld [vmem:[#allocation8 + $0x78] sm:$0xff]
        %v560 = vld [vmem:[#allocation8 + $0x80] sm:$0xff]
        %v561 = vld [vmem:[#allocation8 + $0x88] sm:$0xff]
        %v562 = vld [vmem:[#allocation8 + $0x90] sm:$0xff]
        %v563 = vld [vmem:[#allocation8 + $0x98] sm:$0xff]
        %v564 = vld [vmem:[#allocation8 + $0xa0] sm:$0xff]
        %v565 = vld [vmem:[#allocation8 + $0xa8] sm:$0xff]
        %v566 = vld [vmem:[#allocation8 + $0xb0] sm:$0xff]
        %v567 = vld [vmem:[#allocation8 + $0xb8] sm:$0xff]
        %v568 = vld [vmem:[#allocation8 + $0xc0] sm:$0xff]
        %v569 = vld [vmem:[#allocation8 + $0xc8] sm:$0xff]
        %v570 = vld [vmem:[#allocation8 + $0xd0] sm:$0xff]
        %v571 = vld [vmem:[#allocation8 + $0xd8] sm:$0xff]
        %v572 = vld [vmem:[#allocation8 + $0xe0] sm:$0xff]
        %v573 = vld [vmem:[#allocation8 + $0xe8] sm:$0xff]
        %v574 = vld [vmem:[#allocation8 + $0xf0] sm:$0xff]
        %v575 = vld [vmem:[#allocation8 + $0xf8] sm:$0xff]
        %576 = vmatprep.subr.mxu0 0.0
        %577 = vmatpush1.msra.mxu0 %v544
        %578 = vmatprep.subr.mxu0 0.0
        %579 = vmatpush1.msra.mxu0 %v545
        %580 = vmatprep.subr.mxu0 0.0
        %581 = vmatpush1.msra.mxu0 %v546
        %582 = vmatprep.subr.mxu0 0.0
        %583 = vmatpush1.msra.mxu0 %v547
        %584 = vmatprep.subr.mxu0 0.0
        %585 = vmatpush1.msra.mxu0 %v548
        %586 = vmatprep.subr.mxu0 0.0
        %587 = vmatpush1.msra.mxu0 %v549
        %588 = vmatprep.subr.mxu0 0.0
        %589 = vmatpush1.msra.mxu0 %v550
        %590 = vmatprep.subr.mxu0 0.0
        %591 = vmatpush1.msra.mxu0 %v551
        %592 = vmatprep.subr.mxu0 0.0
        %593 = vmatpush1.msra.mxu0 %v552
        %594 = vmatprep.subr.mxu0 0.0
        %595 = vmatpush1.msra.mxu0 %v553
        %596 = vmatprep.subr.mxu0 0.0
        %597 = vmatpush1.msra.mxu0 %v554
        %598 = vmatprep.subr.mxu0 0.0
        %599 = vmatpush1.msra.mxu0 %v555
        %600 = vmatprep.subr.mxu0 0.0
        %601 = vmatpush1.msra.mxu0 %v556
        %602 = vmatprep.subr.mxu0 0.0
        %603 = vmatpush1.msra.mxu0 %v557
        %604 = vmatprep.subr.mxu0 0.0
        %605 = vmatpush1.msra.mxu0 %v558
        %606 = vmatprep.subr.mxu0 0.0
        %607 = vmatpush1.msra.mxu0 %v559
        %608 = vmatprep.subr.mxu0 0.0
        %609 = vmatpush1.msra.mxu0 %v560
        %610 = vmatprep.subr.mxu0 0.0
        %611 = vmatpush1.msra.mxu0 %v561
        %612 = vmatprep.subr.mxu0 0.0
        %613 = vmatpush1.msra.mxu0 %v562
        %614 = vmatprep.subr.mxu0 0.0
        %615 = vmatpush1.msra.mxu0 %v563
        %616 = vmatprep.subr.mxu0 0.0
        %617 = vmatpush1.msra.mxu0 %v564
        %618 = vmatprep.subr.mxu0 0.0
        %619 = vmatpush1.msra.mxu0 %v565
        %620 = vmatprep.subr.mxu0 0.0
        %621 = vmatpush1.msra.mxu0 %v566
        %622 = vmatprep.subr.mxu0 0.0
        %623 = vmatpush1.msra.mxu0 %v567
        %624 = vmatprep.subr.mxu0 0.0
        %625 = vmatpush1.msra.mxu0 %v568
        %626 = vmatprep.subr.mxu0 0.0
        %627 = vmatpush1.msra.mxu0 %v569
        %628 = vmatprep.subr.mxu0 0.0
        %629 = vmatpush1.msra.mxu0 %v570
        %630 = vmatprep.subr.mxu0 0.0
        %631 = vmatpush1.msra.mxu0 %v571
        %632 = vmatprep.subr.mxu0 0.0
        %633 = vmatpush1.msra.mxu0 %v572
        %634 = vmatprep.subr.mxu0 0.0
        %635 = vmatpush1.msra.mxu0 %v573
        %636 = vmatprep.subr.mxu0 0.0
        %637 = vmatpush1.msra.mxu0 %v574
        %638 = vmatprep.subr.mxu0 0.0
        %639 = vmatpush1.msra.mxu0 %v575
        %640 = vmatprep.mubr.f32.mxu0 %v533
        %641 = vmatmul.mubr.f32.gmra.mrb[0].mxu0 %v532
        %v642 = vpop.f32.mrb[0].mxu0
        %v643 = vadd.f32 0.0, %v642
        %v644 = vpop.f32.mrb[0].mxu0
        %645 = vmatprep.mubr.f32.mxu0 %v535
        %646 = vmatmul.mubr.f32.gmra.mrb[0].mxu0 %v534
        %v647 = vpop.f32.mrb[0].mxu0
        %v648 = vadd.f32 0.0, %v647
        %v649 = vpop.f32.mrb[0].mxu0
        %650 = vmatprep.mubr.f32.mxu0 %v537
        %651 = vmatmul.mubr.f32.gmra.mrb[0].mxu0 %v536
        %v652 = vpop.f32.mrb[0].mxu0
        %v653 = vadd.f32 0.0, %v652
        %v654 = vpop.f32.mrb[0].mxu0
        %655 = vmatprep.mubr.f32.mxu0 %v539
        %656 = vmatmul.mubr.f32.gmra.mrb[0].mxu0 %v538
        %v657 = vpop.f32.mrb[0].mxu0
        %v658 = vadd.f32 0.0, %v657
        %v659 = vpop.f32.mrb[0].mxu0
        %660 = vdwg.mxu0
        %v661 = vadd.f32 %v540, %v643
        %v662 = vadd.f32 %v541, %v648
        %v663 = vadd.f32 %v542, %v653
        %v664 = vadd.f32 %v543, %v658
        %665 = vst [vmem:[#allocation2] sm:$0xff] %v661
        %666 = vst [vmem:[#allocation2 + $0x8] sm:$0xff] %v662
        %667 = vst [vmem:[#allocation2 + $0x10] sm:$0xff] %v663
        %668 = vst [vmem:[#allocation2 + $0x18] sm:$0xff] %v664
        // Predicated region
        $region57: #{_residual_ff_impl.1} parent=39 // pred_check
          %p669 = pneg %p327
        $region58: #{_residual_ff_impl.1} parent=39 // pred_check_branch
          %671 = sbr.rel (%p669) target = $region60
        $region59: #{_residual_ff_impl.1} parent=39 // pred_region
          %v672 = vld [vmem:[#allocation2] sm:$0xff]
          %v673 = vld [vmem:[#allocation2 + $0x8] sm:$0xff]
          %v674 = vld [vmem:[#allocation2 + $0x10] sm:$0xff]
          %v675 = vld [vmem:[#allocation2 + $0x18] sm:$0xff]
          %v676 = vld [vmem:[%s4] sm:$0x1]
          %v678 = vlaneseq
          %v679 = vshrl.u32 %v678, 7
          %v680 = vsub.s32 0, %v679
          %v681 = vrot.slane %v676, %v680
          %v683 = vadd.f32 %v672, %v681
          %v684 = vadd.f32 %v673, %v681
          %v685 = vadd.f32 %v674, %v681
          %v686 = vadd.f32 %v675, %v681
          %v687 = vadd.f32 %v683, %v323
          %v688 = vadd.f32 %v684, %v324
          %v689 = vadd.f32 %v685, %v325
          %v690 = vadd.f32 %v686, %v326
          %691 = vst [vmem:[%s313] sm:$0xff] %v687
          %692 = vst [vmem:[%s313 + $0x8] sm:$0xff] %v688
          %693 = vst [vmem:[%s313 + $0x10] sm:$0xff] %v689
          %694 = vst [vmem:[%s313 + $0x18] sm:$0xff] %v690
        $region60: #{_residual_ff_impl.1} parent=39 // pred_fallthru
          _
        %s695 = sand.u32 %s168, 1
        %s696 = scalar_lea.sflag [#allocation5], %s695
        %s697 = sand.u32 %s168, 1
        %s698 = smul.addr %s697, 32
        %s699 = scalar_lea.vmem [#allocation9], %s698
        // Predicated region
        $region61: #{_residual_ff_impl.1} parent=39 // pred_check
          %p700 = pneg %p178
        $region62: #{_residual_ff_impl.1} parent=39 // pred_check_branch
          %702 = sbr.rel (%p700) target = $region64
        $region63: #{_residual_ff_impl.1} parent=39 // pred_region
          %s703 = smul.u32 4, %s27
          %s705 = ssub.s32 512, 512
          %706 = vsyncadd %s696, %s705
          %s707 = smul.addr %s703, 128
          %s708 = scalar_lea.hbm %s5, %s707
          %s709 = sshll.u32 %s699, 4
          %s710 = int_to_ptr.vmem [resolvable:$true] %s709
          %715 = dma.vmem_to_hbm [thread:$0]  %s710, 512, %s708, %s696, 128, 128, 8
        $region64: #{_residual_ff_impl.1} parent=39 // pred_fallthru
          _
      $region40: #{_residual_ff_impl.1} parent=5 // pred_fallthru
        _
      %p716 = scmp.le.s32.totalorder 2, %s18
      // Predicated region
      $region65: #{_residual_ff_impl.1} parent=5 // pred_check
        %p717 = pneg %p716
      $region66: #{_residual_ff_impl.1} parent=5 // pred_check_branch
        %719 = sbr.rel (%p717) target = $region68
      $region67: #{_residual_ff_impl.1} parent=5 // pred_region
        %s720 = ssub.s32 %s18, 2
        // Predicated region
        $region69: #{_residual_ff_impl.1} parent=67 // pred_check
          %p721 = pneg %p184
        $region70: #{_residual_ff_impl.1} parent=67 // pred_check_branch
          %723 = sbr.rel (%p721) target = $region72
        $region71: #{_residual_ff_impl.1} parent=67 // pred_region
          %s724 = sand.u32 %s169, 1
          %s725 = scalar_lea.sflag [#allocation5], %s724
          %s726 = sand.u32 %s169, 1
          %s727 = smul.addr %s726, 32
          %s728 = scalar_lea.vmem [#allocation9], %s727
          %729 = dma.done %s725, 512
        $region72: #{_residual_ff_impl.1} parent=67 // pred_fallthru
          _
      $region68: #{_residual_ff_impl.1} parent=5 // pred_fallthru
        _
    $region6: #{_residual_ff_impl.1} parent=1 // loop_footer
      %s22 = sadd.s32 1, %s18
    $region7: #{_residual_ff_impl.1} parent=1 // loop_footer_branch
      %17 = sbr.rel target = $region3
    $region8: #{_residual_ff_impl.1} parent=1 // loop_exit
      _
    %730 = vsyncpa [#allocation4], 1
    %s731 = scalar_lea.sflag [#allocation4], 1
    %732 = vsyncpa %s731, 1
    %733 = vsyncpa [#allocation7], 1
    %734 = vsyncpa [#allocation5], 1
    %s735 = scalar_lea.sflag [#allocation5], 1
    %736 = vsyncpa %s735, 1

</llo_original>
